<compile_context>
chip_gen: v5e
topology: v5e:2x2
jax: 0.10.0
libtpu: 0.0.40
codegen_flags: <defaults>
</compile_context>

<pallas_src>
import functools

import jax
import jax.numpy as jnp
import numpy as np
from jax import lax
from jax.experimental import pallas as pl
from jax.experimental.pallas import tpu as pltpu

# ----------------------------- problem sizes -------------------------------
INPUT_DIM = 16
HIDDEN = 32
NUM_LAYERS = 2          # kernel below is specialized to 2 layers
OUTPUT_DIM = 4
BATCH = 2
SEQ = 8


# ------------------------------- kernel ------------------------------------
def lstm_attn_kernel(x_ref,                        # (T*B, D)       f32
                     wih0_ref, b0_ref,             # (D, 4H) (1, 4H)
                     wfused_ref,                   # (2H, 8H) = [[whh0,wih1],[0,whh1]]
                     b1_ref,                       # (1, 4H)
                     attn_ref,                     # (1, H)
                     outw_ref, outb_ref,           # (H, O) (1, O)
                     o_ref,                        # (B, O)
                     *, hidden_size, seq_len, batch):
    H = hidden_size
    T = seq_len
    B = batch

    # ---- hoist loop-invariant loads / broadcasts ----------------------------
    wfused = wfused_ref[...]                          # (2H, 8H)
    attn_w = attn_ref[...]                            # (1, H)
    b1b = jnp.broadcast_to(b1_ref[...], (B, 4 * H))   # hoisted, one broadcast

    # ---- layer-0 input projection: one (T*B, D) x (D, 4H) MXU matmul --------
    gin0_all = (jnp.dot(x_ref[...], wih0_ref[...],
                        preferred_element_type=jnp.float32)
                + b0_ref[...])                        # (T*B, 4H)
    # Pre-split into T static (B,4H) slices in the prologue so the
    # sublane-unaligned slicing is off the recurrence's dependent chain.
    gin0 = [gin0_all[s * B:(s + 1) * B, :] for s in range(T)]

    def cell(gates, c):
        # Two full-vreg EUP ops instead of four sliced activations.
        sg = jax.nn.sigmoid(gates)                    # (B, 4H)
        th = jnp.tanh(gates)                          # (B, 4H)
        i_g = sg[:, 0:H]
        f_g = sg[:, H:2 * H]
        g_g = th[:, 2 * H:3 * H]
        o_g = sg[:, 3 * H:4 * H]
        c_new = f_g * c + i_g * g_g
        h_new = o_g * jnp.tanh(c_new)
        return h_new, c_new

    zeros = jnp.zeros((B, H), jnp.float32)
    h0, c0 = zeros, zeros                             # layer-0 state
    h1, c1 = zeros, zeros                             # layer-1 state

    # online-softmax accumulators for the attention over time
    m_run = jnp.full((B, 1), -jnp.inf, jnp.float32)
    l_run = jnp.zeros((B, 1), jnp.float32)
    acc = jnp.zeros((B, H), jnp.float32)              # sum_t e^{s_t - m} * h1_t

    # ---- fused, fully unrolled, layer-interleaved recurrence ----------------
    # Super-step s runs layer-0 step s and layer-1 step s-1.  Both consume
    # h0_prev (layer-0 output of step s-1) and h1 (layer-1 state of step s-2),
    # so a single fused (B,2H)x(2H,8H) dot feeds both layers.
    for s in range(T + 1):
        if s == 0:
            # First layer-0 step: recurrent state is zero, no matmul needed.
            h0, c0 = cell(gin0[0], c0)
            continue

        h0_prev = h0                                   # explicit: layer-0 out of step s-1
        hcat = jnp.concatenate([h0_prev, h1], axis=1)  # (B, 2H)
        fused = jnp.dot(hcat, wfused,
                        preferred_element_type=jnp.float32)   # (B, 8H)
        # lanes 0:4H   -> h0_prev @ whh0                  (layer-0 recurrent)
        # lanes 4H:8H  -> h0_prev @ wih1 + h1 @ whh1      (layer-1 gates pre-bias)

        pending0 = None
        if s < T:
            g0 = gin0[s] + fused[:, :4 * H]
            pending0 = cell(g0, c0)

        # layer-1 step (s-1)
        g1 = fused[:, 4 * H:] + b1b
        h1, c1 = cell(g1, c1)

        # online attention: score + running softmax accumulation.  This work
        # is off the critical recurrence chain (next super-step only needs
        # h0/h1/c0/c1), so it fills idle VPU/EUP slots.
        score = jnp.sum(h1 * attn_w, axis=-1, keepdims=True)   # (B, 1)
        m_new = jnp.maximum(m_run, score)
        alpha = jnp.exp(m_run - m_new)
        p = jnp.exp(score - m_new)
        l_run = alpha * l_run + p
        acc = alpha * acc + p * h1
        m_run = m_new

        if s < T:
            h0, c0 = pending0

    # ---- epilogue: normalize context, output projection ---------------------
    context = acc / l_run                              # (B, H), exact divide
    out = (jnp.dot(context, outw_ref[...], preferred_element_type=jnp.float32)
           + outb_ref[...])
    o_ref[...] = out.astype(o_ref.dtype)


# ------------------------------- wrapper ------------------------------------
def lstm_attention_x1(x, params):
    """x: (B, T, D) float32, batch_first like the PyTorch module."""
    B, T, D = x.shape
    H = params["w_hh0"].shape[1]
    O = params["out_w"].shape[0]

    # time-major, flattened for the hoisted layer-0 input projection:
    # rows are [t0b0, t0b1, t1b0, t1b1, ...]
    x2d = jnp.transpose(x, (1, 0, 2)).reshape(T * B, D).astype(jnp.float32)

    # pre-transpose weights so the kernel does x @ W
    wih0 = params["w_ih0"].T                                  # (D, 4H)
    b0 = (params["b_ih0"] + params["b_hh0"]).reshape(1, 4 * H)
    whh0 = params["w_hh0"].T                                  # (H, 4H)
    wih1 = params["w_ih1"].T                                  # (H, 4H)
    whh1 = params["w_hh1"].T                                  # (H, 4H)
    b1 = (params["b_ih1"] + params["b_hh1"]).reshape(1, 4 * H)

    # fused recurrence RHS: [[whh0, wih1], [0, whh1]]  -> (2H, 8H)
    w_fused = jnp.concatenate(
        [jnp.concatenate([whh0, wih1], axis=1),
         jnp.concatenate([jnp.zeros((H, 4 * H), jnp.float32), whh1], axis=1)],
        axis=0).astype(jnp.float32)

    attn_w = params["attn_w"].reshape(1, H)                   # (1, H)
    out_w = params["out_w"].T                                 # (H, O)
    out_b = params["out_b"].reshape(1, O)

    kernel = functools.partial(lstm_attn_kernel,
                               hidden_size=H, seq_len=T, batch=B)
    vmem = pl.BlockSpec(memory_space=pltpu.MemorySpace.VMEM)

    # Gridless single program: total VMEM residency is ~100 KiB, far below
    # any generation's scoped limit, so no grid / tiling / Buffered specs.
    return pl.pallas_call(
        kernel,
        out_shape=jax.ShapeDtypeStruct((B, O), jnp.float32),
        in_specs=[vmem] * 8,
        out_specs=vmem,
    )(x2d, wih0, b0, w_fused, b1, attn_w, out_w, out_b)


# ----------------------------- pure-JAX reference ----------------------------
def reference_forward(x, params):
    B, T, D = x.shape
    H = params["w_hh0"].shape[1]

    def lstm_layer(inp, w_ih, w_hh, b_ih, b_hh):
        def step(carry, x_t):
            h, c = carry
            gates = x_t @ w_ih.T + h @ w_hh.T + b_ih + b_hh
            i = jax.nn.sigmoid(gates[:, 0:H])
            f = jax.nn.sigmoid(gates[:, H:2 * H])
            g = jnp.tanh(gates[:, 2 * H:3 * H])
            o = jax.nn.sigmoid(gates[:, 3 * H:4 * H])
            c = f * c + i * g
            h = o * jnp.tanh(c)
            return (h, c), h

        init = (jnp.zeros((B, H), jnp.float32), jnp.zeros((B, H), jnp.float32))
        _, ys = lax.scan(step, init, jnp.transpose(inp, (1, 0, 2)))
        return jnp.transpose(ys, (1, 0, 2))                   # (B, T, H)

    h1 = lstm_layer(x, params["w_ih0"], params["w_hh0"],
                    params["b_ih0"], params["b_hh0"])
    lstm_out = lstm_layer(h1, params["w_ih1"], params["w_hh1"],
                          params["b_ih1"], params["b_hh1"])
    scores = jnp.einsum("bth,h->bt", lstm_out, params["attn_w"].reshape(-1))
    weights = jax.nn.softmax(scores, axis=1)
    context = jnp.sum(lstm_out * weights[:, :, None], axis=1)
    return context @ params["out_w"].T + params["out_b"]


# --------------------------------- main --------------------------------------
if __name__ == "__main__":
    key = jax.random.PRNGKey(0)
    ks = jax.random.split(key, 16)
    s = 1.0 / np.sqrt(HIDDEN)

    def u(k, shape):
        return jax.random.uniform(k, shape, jnp.float32, -s, s)

    params = {
        # LSTM layer 0 (input_dim -> hidden)
        "w_ih0": u(ks[0], (4 * HIDDEN, INPUT_DIM)),
        "w_hh0": u(ks[1], (4 * HIDDEN, HIDDEN)),
        "b_ih0": u(ks[2], (4 * HIDDEN,)),
        "b_hh0": u(ks[3], (4 * HIDDEN,)),
        # LSTM layer 1 (hidden -> hidden)
        "w_ih1": u(ks[4], (4 * HIDDEN, HIDDEN)),
        "w_hh1": u(ks[5], (4 * HIDDEN, HIDDEN)),
        "b_ih1": u(ks[6], (4 * HIDDEN,)),
        "b_hh1": u(ks[7], (4 * HIDDEN,)),
        # attention: Linear(hidden, 1, bias=False)
        "attn_w": u(ks[8], (1, HIDDEN)),
        # output: Linear(hidden, output_dim)
        "out_w": u(ks[9], (OUTPUT_DIM, HIDDEN)),
        "out_b": u(ks[10], (OUTPUT_DIM,)),
    }

    x = jax.random.normal(ks[11], (BATCH, SEQ, INPUT_DIM), jnp.float32)

    out = lstm_attention_x1(x, params)
    out = jax.block_until_ready(out)

    ref = reference_forward(x, params)
    np.testing.assert_allclose(np.asarray(out), np.asarray(ref),
                               rtol=1e-4, atol=1e-4)
    print("KERNEL_OK")
</pallas_src>

<mosaic_0001>
module attributes {stable_mosaic.version = 11 : i64} {
  func.func @lstm_attn_kernel(%arg0: memref<16x16xf32, #tpu.memory_space<vmem>>, %arg1: memref<16x128xf32, #tpu.memory_space<vmem>>, %arg2: memref<1x128xf32, #tpu.memory_space<vmem>>, %arg3: memref<64x256xf32, #tpu.memory_space<vmem>>, %arg4: memref<1x128xf32, #tpu.memory_space<vmem>>, %arg5: memref<1x32xf32, #tpu.memory_space<vmem>>, %arg6: memref<32x4xf32, #tpu.memory_space<vmem>>, %arg7: memref<1x4xf32, #tpu.memory_space<vmem>>, %arg8: memref<2x4xf32, #tpu.memory_space<vmem>>) attributes {dimension_semantics = [], scalar_prefetch = 0 : i64, scratch_operands = 0 : i64, tpu.core_type = #tpu.core_type<tc>} {
    %c0 = arith.constant 0 : index
    %c0_0 = arith.constant 0 : index
    %0 = vector.load %arg3[%c0, %c0_0] : memref<64x256xf32, #tpu.memory_space<vmem>>, vector<64x256xf32>
    %c0_1 = arith.constant 0 : index
    %c0_2 = arith.constant 0 : index
    %1 = vector.load %arg5[%c0_1, %c0_2] : memref<1x32xf32, #tpu.memory_space<vmem>>, vector<1x32xf32>
    %c0_3 = arith.constant 0 : index
    %c0_4 = arith.constant 0 : index
    %2 = vector.load %arg4[%c0_3, %c0_4] : memref<1x128xf32, #tpu.memory_space<vmem>>, vector<1x128xf32>
    %3 = vector.shape_cast %2 : vector<1x128xf32> to vector<1x128xf32>
    %4 = vector.broadcast %3 : vector<1x128xf32> to vector<2x128xf32>
    %c0_5 = arith.constant 0 : index
    %c0_6 = arith.constant 0 : index
    %5 = vector.load %arg0[%c0_5, %c0_6] : memref<16x16xf32, #tpu.memory_space<vmem>>, vector<16x16xf32>
    %c0_7 = arith.constant 0 : index
    %c0_8 = arith.constant 0 : index
    %6 = vector.load %arg1[%c0_7, %c0_8] : memref<16x128xf32, #tpu.memory_space<vmem>>, vector<16x128xf32>
    %cst = arith.constant dense<0.000000e+00> : vector<16x128xf32>
    %7 = tpu.matmul %5, %6, %cst {dimension_numbers = #tpu.dot_dimension_numbers<[1], [0], [0], [1], [0, 0, 1, 1], [], []>} : vector<16x16xf32>, vector<16x128xf32>, vector<16x128xf32> -> vector<16x128xf32>
    %c0_9 = arith.constant 0 : index
    %c0_10 = arith.constant 0 : index
    %8 = vector.load %arg2[%c0_9, %c0_10] : memref<1x128xf32, #tpu.memory_space<vmem>>, vector<1x128xf32>
    %9 = vector.broadcast %8 : vector<1x128xf32> to vector<16x128xf32>
    %10 = arith.addf %7, %9 : vector<16x128xf32>
    %11 = vector.extract_strided_slice %10 {offsets = [0, 0], sizes = [2, 128], strides = [1, 1]} : vector<16x128xf32> to vector<2x128xf32>
    %12 = vector.extract_strided_slice %10 {offsets = [2, 0], sizes = [2, 128], strides = [1, 1]} : vector<16x128xf32> to vector<2x128xf32>
    %13 = vector.extract_strided_slice %10 {offsets = [4, 0], sizes = [2, 128], strides = [1, 1]} : vector<16x128xf32> to vector<2x128xf32>
    %14 = vector.extract_strided_slice %10 {offsets = [6, 0], sizes = [2, 128], strides = [1, 1]} : vector<16x128xf32> to vector<2x128xf32>
    %15 = vector.extract_strided_slice %10 {offsets = [8, 0], sizes = [2, 128], strides = [1, 1]} : vector<16x128xf32> to vector<2x128xf32>
    %16 = vector.extract_strided_slice %10 {offsets = [10, 0], sizes = [2, 128], strides = [1, 1]} : vector<16x128xf32> to vector<2x128xf32>
    %17 = vector.extract_strided_slice %10 {offsets = [12, 0], sizes = [2, 128], strides = [1, 1]} : vector<16x128xf32> to vector<2x128xf32>
    %18 = vector.extract_strided_slice %10 {offsets = [14, 0], sizes = [2, 128], strides = [1, 1]} : vector<16x128xf32> to vector<2x128xf32>
    %cst_11 = arith.constant 0.000000e+00 : f32
    %19 = vector.broadcast %cst_11 : f32 to vector<2x32xf32>
    %cst_12 = arith.constant 0xFF800000 : f32
    %20 = vector.broadcast %cst_12 : f32 to vector<2x1xf32>
    %cst_13 = arith.constant 0.000000e+00 : f32
    %21 = vector.broadcast %cst_13 : f32 to vector<2x1xf32>
    %cst_14 = arith.constant 0.000000e+00 : f32
    %22 = vector.broadcast %cst_14 : f32 to vector<2x32xf32>
    %23 = arith.negf %11 : vector<2x128xf32>
    %24 = math.exp %23 : vector<2x128xf32>
    %cst_15 = arith.constant 1.000000e+00 : f32
    %25 = vector.broadcast %cst_15 : f32 to vector<2x128xf32>
    %26 = arith.addf %25, %24 : vector<2x128xf32>
    %27 = arith.divf %25, %26 : vector<2x128xf32>
    %28 = math.tanh %11 : vector<2x128xf32>
    %29 = vector.extract_strided_slice %27 {offsets = [0, 0], sizes = [2, 32], strides = [1, 1]} : vector<2x128xf32> to vector<2x32xf32>
    %30 = vector.extract_strided_slice %27 {offsets = [0, 32], sizes = [2, 32], strides = [1, 1]} : vector<2x128xf32> to vector<2x32xf32>
    %31 = vector.extract_strided_slice %28 {offsets = [0, 64], sizes = [2, 32], strides = [1, 1]} : vector<2x128xf32> to vector<2x32xf32>
    %32 = vector.extract_strided_slice %27 {offsets = [0, 96], sizes = [2, 32], strides = [1, 1]} : vector<2x128xf32> to vector<2x32xf32>
    %33 = arith.mulf %30, %19 : vector<2x32xf32>
    %34 = arith.mulf %29, %31 : vector<2x32xf32>
    %35 = arith.addf %33, %34 : vector<2x32xf32>
    %36 = math.tanh %35 : vector<2x32xf32>
    %37 = arith.mulf %32, %36 : vector<2x32xf32>
    %38 = tpu.concatenate %37, %19 in 1 : vector<2x32xf32>, vector<2x32xf32> -> vector<2x64xf32>
    %cst_16 = arith.constant dense<0.000000e+00> : vector<2x256xf32>
    %39 = tpu.matmul %38, %0, %cst_16 {dimension_numbers = #tpu.dot_dimension_numbers<[1], [0], [0], [1], [0, 0, 1, 1], [], []>} : vector<2x64xf32>, vector<64x256xf32>, vector<2x256xf32> -> vector<2x256xf32>
    %40 = vector.extract_strided_slice %39 {offsets = [0, 0], sizes = [2, 128], strides = [1, 1]} : vector<2x256xf32> to vector<2x128xf32>
    %41 = arith.addf %12, %40 : vector<2x128xf32>
    %42 = arith.negf %41 : vector<2x128xf32>
    %43 = math.exp %42 : vector<2x128xf32>
    %cst_17 = arith.constant 1.000000e+00 : f32
    %44 = vector.broadcast %cst_17 : f32 to vector<2x128xf32>
    %45 = arith.addf %44, %43 : vector<2x128xf32>
    %46 = arith.divf %44, %45 : vector<2x128xf32>
    %47 = math.tanh %41 : vector<2x128xf32>
    %48 = vector.extract_strided_slice %46 {offsets = [0, 0], sizes = [2, 32], strides = [1, 1]} : vector<2x128xf32> to vector<2x32xf32>
    %49 = vector.extract_strided_slice %46 {offsets = [0, 32], sizes = [2, 32], strides = [1, 1]} : vector<2x128xf32> to vector<2x32xf32>
    %50 = vector.extract_strided_slice %47 {offsets = [0, 64], sizes = [2, 32], strides = [1, 1]} : vector<2x128xf32> to vector<2x32xf32>
    %51 = vector.extract_strided_slice %46 {offsets = [0, 96], sizes = [2, 32], strides = [1, 1]} : vector<2x128xf32> to vector<2x32xf32>
    %52 = arith.mulf %49, %35 : vector<2x32xf32>
    %53 = arith.mulf %48, %50 : vector<2x32xf32>
    %54 = arith.addf %52, %53 : vector<2x32xf32>
    %55 = math.tanh %54 : vector<2x32xf32>
    %56 = arith.mulf %51, %55 : vector<2x32xf32>
    %57 = vector.extract_strided_slice %39 {offsets = [0, 128], sizes = [2, 128], strides = [1, 1]} : vector<2x256xf32> to vector<2x128xf32>
    %58 = arith.addf %57, %4 : vector<2x128xf32>
    %59 = arith.negf %58 : vector<2x128xf32>
    %60 = math.exp %59 : vector<2x128xf32>
    %cst_18 = arith.constant 1.000000e+00 : f32
    %61 = vector.broadcast %cst_18 : f32 to vector<2x128xf32>
    %62 = arith.addf %61, %60 : vector<2x128xf32>
    %63 = arith.divf %61, %62 : vector<2x128xf32>
    %64 = math.tanh %58 : vector<2x128xf32>
    %65 = vector.extract_strided_slice %63 {offsets = [0, 0], sizes = [2, 32], strides = [1, 1]} : vector<2x128xf32> to vector<2x32xf32>
    %66 = vector.extract_strided_slice %63 {offsets = [0, 32], sizes = [2, 32], strides = [1, 1]} : vector<2x128xf32> to vector<2x32xf32>
    %67 = vector.extract_strided_slice %64 {offsets = [0, 64], sizes = [2, 32], strides = [1, 1]} : vector<2x128xf32> to vector<2x32xf32>
    %68 = vector.extract_strided_slice %63 {offsets = [0, 96], sizes = [2, 32], strides = [1, 1]} : vector<2x128xf32> to vector<2x32xf32>
    %69 = arith.mulf %66, %19 : vector<2x32xf32>
    %70 = arith.mulf %65, %67 : vector<2x32xf32>
    %71 = arith.addf %69, %70 : vector<2x32xf32>
    %72 = math.tanh %71 : vector<2x32xf32>
    %73 = arith.mulf %68, %72 : vector<2x32xf32>
    %74 = vector.broadcast %1 : vector<1x32xf32> to vector<2x32xf32>
    %75 = arith.mulf %73, %74 : vector<2x32xf32>
    %cst_19 = arith.constant dense<0.000000e+00> : vector<2xf32>
    %76 = vector.multi_reduction <add>, %75, %cst_19 [1] : vector<2x32xf32> to vector<2xf32>
    %77 = vector.shape_cast %76 : vector<2xf32> to vector<2x1xf32>
    %78 = arith.maximumf %20, %77 : vector<2x1xf32>
    %79 = arith.subf %20, %78 : vector<2x1xf32>
    %80 = math.exp %79 : vector<2x1xf32>
    %81 = arith.subf %77, %78 : vector<2x1xf32>
    %82 = math.exp %81 : vector<2x1xf32>
    %83 = arith.mulf %80, %21 : vector<2x1xf32>
    %84 = arith.addf %83, %82 : vector<2x1xf32>
    %85 = vector.broadcast %80 : vector<2x1xf32> to vector<2x32xf32>
    %86 = arith.mulf %85, %22 : vector<2x32xf32>
    %87 = vector.broadcast %82 : vector<2x1xf32> to vector<2x32xf32>
    %88 = arith.mulf %87, %73 : vector<2x32xf32>
    %89 = arith.addf %86, %88 : vector<2x32xf32>
    %90 = tpu.concatenate %56, %73 in 1 : vector<2x32xf32>, vector<2x32xf32> -> vector<2x64xf32>
    %cst_20 = arith.constant dense<0.000000e+00> : vector<2x256xf32>
    %91 = tpu.matmul %90, %0, %cst_20 {dimension_numbers = #tpu.dot_dimension_numbers<[1], [0], [0], [1], [0, 0, 1, 1], [], []>} : vector<2x64xf32>, vector<64x256xf32>, vector<2x256xf32> -> vector<2x256xf32>
    %92 = vector.extract_strided_slice %91 {offsets = [0, 0], sizes = [2, 128], strides = [1, 1]} : vector<2x256xf32> to vector<2x128xf32>
    %93 = arith.addf %13, %92 : vector<2x128xf32>
    %94 = arith.negf %93 : vector<2x128xf32>
    %95 = math.exp %94 : vector<2x128xf32>
    %cst_21 = arith.constant 1.000000e+00 : f32
    %96 = vector.broadcast %cst_21 : f32 to vector<2x128xf32>
    %97 = arith.addf %96, %95 : vector<2x128xf32>
    %98 = arith.divf %96, %97 : vector<2x128xf32>
    %99 = math.tanh %93 : vector<2x128xf32>
    %100 = vector.extract_strided_slice %98 {offsets = [0, 0], sizes = [2, 32], strides = [1, 1]} : vector<2x128xf32> to vector<2x32xf32>
    %101 = vector.extract_strided_slice %98 {offsets = [0, 32], sizes = [2, 32], strides = [1, 1]} : vector<2x128xf32> to vector<2x32xf32>
    %102 = vector.extract_strided_slice %99 {offsets = [0, 64], sizes = [2, 32], strides = [1, 1]} : vector<2x128xf32> to vector<2x32xf32>
    %103 = vector.extract_strided_slice %98 {offsets = [0, 96], sizes = [2, 32], strides = [1, 1]} : vector<2x128xf32> to vector<2x32xf32>
    %104 = arith.mulf %101, %54 : vector<2x32xf32>
    %105 = arith.mulf %100, %102 : vector<2x32xf32>
    %106 = arith.addf %104, %105 : vector<2x32xf32>
    %107 = math.tanh %106 : vector<2x32xf32>
    %108 = arith.mulf %103, %107 : vector<2x32xf32>
    %109 = vector.extract_strided_slice %91 {offsets = [0, 128], sizes = [2, 128], strides = [1, 1]} : vector<2x256xf32> to vector<2x128xf32>
    %110 = arith.addf %109, %4 : vector<2x128xf32>
    %111 = arith.negf %110 : vector<2x128xf32>
    %112 = math.exp %111 : vector<2x128xf32>
    %cst_22 = arith.constant 1.000000e+00 : f32
    %113 = vector.broadcast %cst_22 : f32 to vector<2x128xf32>
    %114 = arith.addf %113, %112 : vector<2x128xf32>
    %115 = arith.divf %113, %114 : vector<2x128xf32>
    %116 = math.tanh %110 : vector<2x128xf32>
    %117 = vector.extract_strided_slice %115 {offsets = [0, 0], sizes = [2, 32], strides = [1, 1]} : vector<2x128xf32> to vector<2x32xf32>
    %118 = vector.extract_strided_slice %115 {offsets = [0, 32], sizes = [2, 32], strides = [1, 1]} : vector<2x128xf32> to vector<2x32xf32>
    %119 = vector.extract_strided_slice %116 {offsets = [0, 64], sizes = [2, 32], strides = [1, 1]} : vector<2x128xf32> to vector<2x32xf32>
    %120 = vector.extract_strided_slice %115 {offsets = [0, 96], sizes = [2, 32], strides = [1, 1]} : vector<2x128xf32> to vector<2x32xf32>
    %121 = arith.mulf %118, %71 : vector<2x32xf32>
    %122 = arith.mulf %117, %119 : vector<2x32xf32>
    %123 = arith.addf %121, %122 : vector<2x32xf32>
    %124 = math.tanh %123 : vector<2x32xf32>
    %125 = arith.mulf %120, %124 : vector<2x32xf32>
    %126 = vector.broadcast %1 : vector<1x32xf32> to vector<2x32xf32>
    %127 = arith.mulf %125, %126 : vector<2x32xf32>
    %cst_23 = arith.constant dense<0.000000e+00> : vector<2xf32>
    %128 = vector.multi_reduction <add>, %127, %cst_23 [1] : vector<2x32xf32> to vector<2xf32>
    %129 = vector.shape_cast %128 : vector<2xf32> to vector<2x1xf32>
    %130 = arith.maximumf %78, %129 : vector<2x1xf32>
    %131 = arith.subf %78, %130 : vector<2x1xf32>
    %132 = math.exp %131 : vector<2x1xf32>
    %133 = arith.subf %129, %130 : vector<2x1xf32>
    %134 = math.exp %133 : vector<2x1xf32>
    %135 = arith.mulf %132, %84 : vector<2x1xf32>
    %136 = arith.addf %135, %134 : vector<2x1xf32>
    %137 = vector.broadcast %132 : vector<2x1xf32> to vector<2x32xf32>
    %138 = arith.mulf %137, %89 : vector<2x32xf32>
    %139 = vector.broadcast %134 : vector<2x1xf32> to vector<2x32xf32>
    %140 = arith.mulf %139, %125 : vector<2x32xf32>
    %141 = arith.addf %138, %140 : vector<2x32xf32>
    %142 = tpu.concatenate %108, %125 in 1 : vector<2x32xf32>, vector<2x32xf32> -> vector<2x64xf32>
    %cst_24 = arith.constant dense<0.000000e+00> : vector<2x256xf32>
    %143 = tpu.matmul %142, %0, %cst_24 {dimension_numbers = #tpu.dot_dimension_numbers<[1], [0], [0], [1], [0, 0, 1, 1], [], []>} : vector<2x64xf32>, vector<64x256xf32>, vector<2x256xf32> -> vector<2x256xf32>
    %144 = vector.extract_strided_slice %143 {offsets = [0, 0], sizes = [2, 128], strides = [1, 1]} : vector<2x256xf32> to vector<2x128xf32>
    %145 = arith.addf %14, %144 : vector<2x128xf32>
    %146 = arith.negf %145 : vector<2x128xf32>
    %147 = math.exp %146 : vector<2x128xf32>
    %cst_25 = arith.constant 1.000000e+00 : f32
    %148 = vector.broadcast %cst_25 : f32 to vector<2x128xf32>
    %149 = arith.addf %148, %147 : vector<2x128xf32>
    %150 = arith.divf %148, %149 : vector<2x128xf32>
    %151 = math.tanh %145 : vector<2x128xf32>
    %152 = vector.extract_strided_slice %150 {offsets = [0, 0], sizes = [2, 32], strides = [1, 1]} : vector<2x128xf32> to vector<2x32xf32>
    %153 = vector.extract_strided_slice %150 {offsets = [0, 32], sizes = [2, 32], strides = [1, 1]} : vector<2x128xf32> to vector<2x32xf32>
    %154 = vector.extract_strided_slice %151 {offsets = [0, 64], sizes = [2, 32], strides = [1, 1]} : vector<2x128xf32> to vector<2x32xf32>
    %155 = vector.extract_strided_slice %150 {offsets = [0, 96], sizes = [2, 32], strides = [1, 1]} : vector<2x128xf32> to vector<2x32xf32>
    %156 = arith.mulf %153, %106 : vector<2x32xf32>
    %157 = arith.mulf %152, %154 : vector<2x32xf32>
    %158 = arith.addf %156, %157 : vector<2x32xf32>
    %159 = math.tanh %158 : vector<2x32xf32>
    %160 = arith.mulf %155, %159 : vector<2x32xf32>
    %161 = vector.extract_strided_slice %143 {offsets = [0, 128], sizes = [2, 128], strides = [1, 1]} : vector<2x256xf32> to vector<2x128xf32>
    %162 = arith.addf %161, %4 : vector<2x128xf32>
    %163 = arith.negf %162 : vector<2x128xf32>
    %164 = math.exp %163 : vector<2x128xf32>
    %cst_26 = arith.constant 1.000000e+00 : f32
    %165 = vector.broadcast %cst_26 : f32 to vector<2x128xf32>
    %166 = arith.addf %165, %164 : vector<2x128xf32>
    %167 = arith.divf %165, %166 : vector<2x128xf32>
    %168 = math.tanh %162 : vector<2x128xf32>
    %169 = vector.extract_strided_slice %167 {offsets = [0, 0], sizes = [2, 32], strides = [1, 1]} : vector<2x128xf32> to vector<2x32xf32>
    %170 = vector.extract_strided_slice %167 {offsets = [0, 32], sizes = [2, 32], strides = [1, 1]} : vector<2x128xf32> to vector<2x32xf32>
    %171 = vector.extract_strided_slice %168 {offsets = [0, 64], sizes = [2, 32], strides = [1, 1]} : vector<2x128xf32> to vector<2x32xf32>
    %172 = vector.extract_strided_slice %167 {offsets = [0, 96], sizes = [2, 32], strides = [1, 1]} : vector<2x128xf32> to vector<2x32xf32>
    %173 = arith.mulf %170, %123 : vector<2x32xf32>
    %174 = arith.mulf %169, %171 : vector<2x32xf32>
    %175 = arith.addf %173, %174 : vector<2x32xf32>
    %176 = math.tanh %175 : vector<2x32xf32>
    %177 = arith.mulf %172, %176 : vector<2x32xf32>
    %178 = vector.broadcast %1 : vector<1x32xf32> to vector<2x32xf32>
    %179 = arith.mulf %177, %178 : vector<2x32xf32>
    %cst_27 = arith.constant dense<0.000000e+00> : vector<2xf32>
    %180 = vector.multi_reduction <add>, %179, %cst_27 [1] : vector<2x32xf32> to vector<2xf32>
    %181 = vector.shape_cast %180 : vector<2xf32> to vector<2x1xf32>
    %182 = arith.maximumf %130, %181 : vector<2x1xf32>
    %183 = arith.subf %130, %182 : vector<2x1xf32>
    %184 = math.exp %183 : vector<2x1xf32>
    %185 = arith.subf %181, %182 : vector<2x1xf32>
    %186 = math.exp %185 : vector<2x1xf32>
    %187 = arith.mulf %184, %136 : vector<2x1xf32>
    %188 = arith.addf %187, %186 : vector<2x1xf32>
    %189 = vector.broadcast %184 : vector<2x1xf32> to vector<2x32xf32>
    %190 = arith.mulf %189, %141 : vector<2x32xf32>
    %191 = vector.broadcast %186 : vector<2x1xf32> to vector<2x32xf32>
    %192 = arith.mulf %191, %177 : vector<2x32xf32>
    %193 = arith.addf %190, %192 : vector<2x32xf32>
    %194 = tpu.concatenate %160, %177 in 1 : vector<2x32xf32>, vector<2x32xf32> -> vector<2x64xf32>
    %cst_28 = arith.constant dense<0.000000e+00> : vector<2x256xf32>
    %195 = tpu.matmul %194, %0, %cst_28 {dimension_numbers = #tpu.dot_dimension_numbers<[1], [0], [0], [1], [0, 0, 1, 1], [], []>} : vector<2x64xf32>, vector<64x256xf32>, vector<2x256xf32> -> vector<2x256xf32>
    %196 = vector.extract_strided_slice %195 {offsets = [0, 0], sizes = [2, 128], strides = [1, 1]} : vector<2x256xf32> to vector<2x128xf32>
    %197 = arith.addf %15, %196 : vector<2x128xf32>
    %198 = arith.negf %197 : vector<2x128xf32>
    %199 = math.exp %198 : vector<2x128xf32>
    %cst_29 = arith.constant 1.000000e+00 : f32
    %200 = vector.broadcast %cst_29 : f32 to vector<2x128xf32>
    %201 = arith.addf %200, %199 : vector<2x128xf32>
    %202 = arith.divf %200, %201 : vector<2x128xf32>
    %203 = math.tanh %197 : vector<2x128xf32>
    %204 = vector.extract_strided_slice %202 {offsets = [0, 0], sizes = [2, 32], strides = [1, 1]} : vector<2x128xf32> to vector<2x32xf32>
    %205 = vector.extract_strided_slice %202 {offsets = [0, 32], sizes = [2, 32], strides = [1, 1]} : vector<2x128xf32> to vector<2x32xf32>
    %206 = vector.extract_strided_slice %203 {offsets = [0, 64], sizes = [2, 32], strides = [1, 1]} : vector<2x128xf32> to vector<2x32xf32>
    %207 = vector.extract_strided_slice %202 {offsets = [0, 96], sizes = [2, 32], strides = [1, 1]} : vector<2x128xf32> to vector<2x32xf32>
    %208 = arith.mulf %205, %158 : vector<2x32xf32>
    %209 = arith.mulf %204, %206 : vector<2x32xf32>
    %210 = arith.addf %208, %209 : vector<2x32xf32>
    %211 = math.tanh %210 : vector<2x32xf32>
    %212 = arith.mulf %207, %211 : vector<2x32xf32>
    %213 = vector.extract_strided_slice %195 {offsets = [0, 128], sizes = [2, 128], strides = [1, 1]} : vector<2x256xf32> to vector<2x128xf32>
    %214 = arith.addf %213, %4 : vector<2x128xf32>
    %215 = arith.negf %214 : vector<2x128xf32>
    %216 = math.exp %215 : vector<2x128xf32>
    %cst_30 = arith.constant 1.000000e+00 : f32
    %217 = vector.broadcast %cst_30 : f32 to vector<2x128xf32>
    %218 = arith.addf %217, %216 : vector<2x128xf32>
    %219 = arith.divf %217, %218 : vector<2x128xf32>
    %220 = math.tanh %214 : vector<2x128xf32>
    %221 = vector.extract_strided_slice %219 {offsets = [0, 0], sizes = [2, 32], strides = [1, 1]} : vector<2x128xf32> to vector<2x32xf32>
    %222 = vector.extract_strided_slice %219 {offsets = [0, 32], sizes = [2, 32], strides = [1, 1]} : vector<2x128xf32> to vector<2x32xf32>
    %223 = vector.extract_strided_slice %220 {offsets = [0, 64], sizes = [2, 32], strides = [1, 1]} : vector<2x128xf32> to vector<2x32xf32>
    %224 = vector.extract_strided_slice %219 {offsets = [0, 96], sizes = [2, 32], strides = [1, 1]} : vector<2x128xf32> to vector<2x32xf32>
    %225 = arith.mulf %222, %175 : vector<2x32xf32>
    %226 = arith.mulf %221, %223 : vector<2x32xf32>
    %227 = arith.addf %225, %226 : vector<2x32xf32>
    %228 = math.tanh %227 : vector<2x32xf32>
    %229 = arith.mulf %224, %228 : vector<2x32xf32>
    %230 = vector.broadcast %1 : vector<1x32xf32> to vector<2x32xf32>
    %231 = arith.mulf %229, %230 : vector<2x32xf32>
    %cst_31 = arith.constant dense<0.000000e+00> : vector<2xf32>
    %232 = vector.multi_reduction <add>, %231, %cst_31 [1] : vector<2x32xf32> to vector<2xf32>
    %233 = vector.shape_cast %232 : vector<2xf32> to vector<2x1xf32>
    %234 = arith.maximumf %182, %233 : vector<2x1xf32>
    %235 = arith.subf %182, %234 : vector<2x1xf32>
    %236 = math.exp %235 : vector<2x1xf32>
    %237 = arith.subf %233, %234 : vector<2x1xf32>
    %238 = math.exp %237 : vector<2x1xf32>
    %239 = arith.mulf %236, %188 : vector<2x1xf32>
    %240 = arith.addf %239, %238 : vector<2x1xf32>
    %241 = vector.broadcast %236 : vector<2x1xf32> to vector<2x32xf32>
    %242 = arith.mulf %241, %193 : vector<2x32xf32>
    %243 = vector.broadcast %238 : vector<2x1xf32> to vector<2x32xf32>
    %244 = arith.mulf %243, %229 : vector<2x32xf32>
    %245 = arith.addf %242, %244 : vector<2x32xf32>
    %246 = tpu.concatenate %212, %229 in 1 : vector<2x32xf32>, vector<2x32xf32> -> vector<2x64xf32>
    %cst_32 = arith.constant dense<0.000000e+00> : vector<2x256xf32>
    %247 = tpu.matmul %246, %0, %cst_32 {dimension_numbers = #tpu.dot_dimension_numbers<[1], [0], [0], [1], [0, 0, 1, 1], [], []>} : vector<2x64xf32>, vector<64x256xf32>, vector<2x256xf32> -> vector<2x256xf32>
    %248 = vector.extract_strided_slice %247 {offsets = [0, 0], sizes = [2, 128], strides = [1, 1]} : vector<2x256xf32> to vector<2x128xf32>
    %249 = arith.addf %16, %248 : vector<2x128xf32>
    %250 = arith.negf %249 : vector<2x128xf32>
    %251 = math.exp %250 : vector<2x128xf32>
    %cst_33 = arith.constant 1.000000e+00 : f32
    %252 = vector.broadcast %cst_33 : f32 to vector<2x128xf32>
    %253 = arith.addf %252, %251 : vector<2x128xf32>
    %254 = arith.divf %252, %253 : vector<2x128xf32>
    %255 = math.tanh %249 : vector<2x128xf32>
    %256 = vector.extract_strided_slice %254 {offsets = [0, 0], sizes = [2, 32], strides = [1, 1]} : vector<2x128xf32> to vector<2x32xf32>
    %257 = vector.extract_strided_slice %254 {offsets = [0, 32], sizes = [2, 32], strides = [1, 1]} : vector<2x128xf32> to vector<2x32xf32>
    %258 = vector.extract_strided_slice %255 {offsets = [0, 64], sizes = [2, 32], strides = [1, 1]} : vector<2x128xf32> to vector<2x32xf32>
    %259 = vector.extract_strided_slice %254 {offsets = [0, 96], sizes = [2, 32], strides = [1, 1]} : vector<2x128xf32> to vector<2x32xf32>
    %260 = arith.mulf %257, %210 : vector<2x32xf32>
    %261 = arith.mulf %256, %258 : vector<2x32xf32>
    %262 = arith.addf %260, %261 : vector<2x32xf32>
    %263 = math.tanh %262 : vector<2x32xf32>
    %264 = arith.mulf %259, %263 : vector<2x32xf32>
    %265 = vector.extract_strided_slice %247 {offsets = [0, 128], sizes = [2, 128], strides = [1, 1]} : vector<2x256xf32> to vector<2x128xf32>
    %266 = arith.addf %265, %4 : vector<2x128xf32>
    %267 = arith.negf %266 : vector<2x128xf32>
    %268 = math.exp %267 : vector<2x128xf32>
    %cst_34 = arith.constant 1.000000e+00 : f32
    %269 = vector.broadcast %cst_34 : f32 to vector<2x128xf32>
    %270 = arith.addf %269, %268 : vector<2x128xf32>
    %271 = arith.divf %269, %270 : vector<2x128xf32>
    %272 = math.tanh %266 : vector<2x128xf32>
    %273 = vector.extract_strided_slice %271 {offsets = [0, 0], sizes = [2, 32], strides = [1, 1]} : vector<2x128xf32> to vector<2x32xf32>
    %274 = vector.extract_strided_slice %271 {offsets = [0, 32], sizes = [2, 32], strides = [1, 1]} : vector<2x128xf32> to vector<2x32xf32>
    %275 = vector.extract_strided_slice %272 {offsets = [0, 64], sizes = [2, 32], strides = [1, 1]} : vector<2x128xf32> to vector<2x32xf32>
    %276 = vector.extract_strided_slice %271 {offsets = [0, 96], sizes = [2, 32], strides = [1, 1]} : vector<2x128xf32> to vector<2x32xf32>
    %277 = arith.mulf %274, %227 : vector<2x32xf32>
    %278 = arith.mulf %273, %275 : vector<2x32xf32>
    %279 = arith.addf %277, %278 : vector<2x32xf32>
    %280 = math.tanh %279 : vector<2x32xf32>
    %281 = arith.mulf %276, %280 : vector<2x32xf32>
    %282 = vector.broadcast %1 : vector<1x32xf32> to vector<2x32xf32>
    %283 = arith.mulf %281, %282 : vector<2x32xf32>
    %cst_35 = arith.constant dense<0.000000e+00> : vector<2xf32>
    %284 = vector.multi_reduction <add>, %283, %cst_35 [1] : vector<2x32xf32> to vector<2xf32>
    %285 = vector.shape_cast %284 : vector<2xf32> to vector<2x1xf32>
    %286 = arith.maximumf %234, %285 : vector<2x1xf32>
    %287 = arith.subf %234, %286 : vector<2x1xf32>
    %288 = math.exp %287 : vector<2x1xf32>
    %289 = arith.subf %285, %286 : vector<2x1xf32>
    %290 = math.exp %289 : vector<2x1xf32>
    %291 = arith.mulf %288, %240 : vector<2x1xf32>
    %292 = arith.addf %291, %290 : vector<2x1xf32>
    %293 = vector.broadcast %288 : vector<2x1xf32> to vector<2x32xf32>
    %294 = arith.mulf %293, %245 : vector<2x32xf32>
    %295 = vector.broadcast %290 : vector<2x1xf32> to vector<2x32xf32>
    %296 = arith.mulf %295, %281 : vector<2x32xf32>
    %297 = arith.addf %294, %296 : vector<2x32xf32>
    %298 = tpu.concatenate %264, %281 in 1 : vector<2x32xf32>, vector<2x32xf32> -> vector<2x64xf32>
    %cst_36 = arith.constant dense<0.000000e+00> : vector<2x256xf32>
    %299 = tpu.matmul %298, %0, %cst_36 {dimension_numbers = #tpu.dot_dimension_numbers<[1], [0], [0], [1], [0, 0, 1, 1], [], []>} : vector<2x64xf32>, vector<64x256xf32>, vector<2x256xf32> -> vector<2x256xf32>
    %300 = vector.extract_strided_slice %299 {offsets = [0, 0], sizes = [2, 128], strides = [1, 1]} : vector<2x256xf32> to vector<2x128xf32>
    %301 = arith.addf %17, %300 : vector<2x128xf32>
    %302 = arith.negf %301 : vector<2x128xf32>
    %303 = math.exp %302 : vector<2x128xf32>
    %cst_37 = arith.constant 1.000000e+00 : f32
    %304 = vector.broadcast %cst_37 : f32 to vector<2x128xf32>
    %305 = arith.addf %304, %303 : vector<2x128xf32>
    %306 = arith.divf %304, %305 : vector<2x128xf32>
    %307 = math.tanh %301 : vector<2x128xf32>
    %308 = vector.extract_strided_slice %306 {offsets = [0, 0], sizes = [2, 32], strides = [1, 1]} : vector<2x128xf32> to vector<2x32xf32>
    %309 = vector.extract_strided_slice %306 {offsets = [0, 32], sizes = [2, 32], strides = [1, 1]} : vector<2x128xf32> to vector<2x32xf32>
    %310 = vector.extract_strided_slice %307 {offsets = [0, 64], sizes = [2, 32], strides = [1, 1]} : vector<2x128xf32> to vector<2x32xf32>
    %311 = vector.extract_strided_slice %306 {offsets = [0, 96], sizes = [2, 32], strides = [1, 1]} : vector<2x128xf32> to vector<2x32xf32>
    %312 = arith.mulf %309, %262 : vector<2x32xf32>
    %313 = arith.mulf %308, %310 : vector<2x32xf32>
    %314 = arith.addf %312, %313 : vector<2x32xf32>
    %315 = math.tanh %314 : vector<2x32xf32>
    %316 = arith.mulf %311, %315 : vector<2x32xf32>
    %317 = vector.extract_strided_slice %299 {offsets = [0, 128], sizes = [2, 128], strides = [1, 1]} : vector<2x256xf32> to vector<2x128xf32>
    %318 = arith.addf %317, %4 : vector<2x128xf32>
    %319 = arith.negf %318 : vector<2x128xf32>
    %320 = math.exp %319 : vector<2x128xf32>
    %cst_38 = arith.constant 1.000000e+00 : f32
    %321 = vector.broadcast %cst_38 : f32 to vector<2x128xf32>
    %322 = arith.addf %321, %320 : vector<2x128xf32>
    %323 = arith.divf %321, %322 : vector<2x128xf32>
    %324 = math.tanh %318 : vector<2x128xf32>
    %325 = vector.extract_strided_slice %323 {offsets = [0, 0], sizes = [2, 32], strides = [1, 1]} : vector<2x128xf32> to vector<2x32xf32>
    %326 = vector.extract_strided_slice %323 {offsets = [0, 32], sizes = [2, 32], strides = [1, 1]} : vector<2x128xf32> to vector<2x32xf32>
    %327 = vector.extract_strided_slice %324 {offsets = [0, 64], sizes = [2, 32], strides = [1, 1]} : vector<2x128xf32> to vector<2x32xf32>
    %328 = vector.extract_strided_slice %323 {offsets = [0, 96], sizes = [2, 32], strides = [1, 1]} : vector<2x128xf32> to vector<2x32xf32>
    %329 = arith.mulf %326, %279 : vector<2x32xf32>
    %330 = arith.mulf %325, %327 : vector<2x32xf32>
    %331 = arith.addf %329, %330 : vector<2x32xf32>
    %332 = math.tanh %331 : vector<2x32xf32>
    %333 = arith.mulf %328, %332 : vector<2x32xf32>
    %334 = vector.broadcast %1 : vector<1x32xf32> to vector<2x32xf32>
    %335 = arith.mulf %333, %334 : vector<2x32xf32>
    %cst_39 = arith.constant dense<0.000000e+00> : vector<2xf32>
    %336 = vector.multi_reduction <add>, %335, %cst_39 [1] : vector<2x32xf32> to vector<2xf32>
    %337 = vector.shape_cast %336 : vector<2xf32> to vector<2x1xf32>
    %338 = arith.maximumf %286, %337 : vector<2x1xf32>
    %339 = arith.subf %286, %338 : vector<2x1xf32>
    %340 = math.exp %339 : vector<2x1xf32>
    %341 = arith.subf %337, %338 : vector<2x1xf32>
    %342 = math.exp %341 : vector<2x1xf32>
    %343 = arith.mulf %340, %292 : vector<2x1xf32>
    %344 = arith.addf %343, %342 : vector<2x1xf32>
    %345 = vector.broadcast %340 : vector<2x1xf32> to vector<2x32xf32>
    %346 = arith.mulf %345, %297 : vector<2x32xf32>
    %347 = vector.broadcast %342 : vector<2x1xf32> to vector<2x32xf32>
    %348 = arith.mulf %347, %333 : vector<2x32xf32>
    %349 = arith.addf %346, %348 : vector<2x32xf32>
    %350 = tpu.concatenate %316, %333 in 1 : vector<2x32xf32>, vector<2x32xf32> -> vector<2x64xf32>
    %cst_40 = arith.constant dense<0.000000e+00> : vector<2x256xf32>
    %351 = tpu.matmul %350, %0, %cst_40 {dimension_numbers = #tpu.dot_dimension_numbers<[1], [0], [0], [1], [0, 0, 1, 1], [], []>} : vector<2x64xf32>, vector<64x256xf32>, vector<2x256xf32> -> vector<2x256xf32>
    %352 = vector.extract_strided_slice %351 {offsets = [0, 0], sizes = [2, 128], strides = [1, 1]} : vector<2x256xf32> to vector<2x128xf32>
    %353 = arith.addf %18, %352 : vector<2x128xf32>
    %354 = arith.negf %353 : vector<2x128xf32>
    %355 = math.exp %354 : vector<2x128xf32>
    %cst_41 = arith.constant 1.000000e+00 : f32
    %356 = vector.broadcast %cst_41 : f32 to vector<2x128xf32>
    %357 = arith.addf %356, %355 : vector<2x128xf32>
    %358 = arith.divf %356, %357 : vector<2x128xf32>
    %359 = math.tanh %353 : vector<2x128xf32>
    %360 = vector.extract_strided_slice %358 {offsets = [0, 0], sizes = [2, 32], strides = [1, 1]} : vector<2x128xf32> to vector<2x32xf32>
    %361 = vector.extract_strided_slice %358 {offsets = [0, 32], sizes = [2, 32], strides = [1, 1]} : vector<2x128xf32> to vector<2x32xf32>
    %362 = vector.extract_strided_slice %359 {offsets = [0, 64], sizes = [2, 32], strides = [1, 1]} : vector<2x128xf32> to vector<2x32xf32>
    %363 = vector.extract_strided_slice %358 {offsets = [0, 96], sizes = [2, 32], strides = [1, 1]} : vector<2x128xf32> to vector<2x32xf32>
    %364 = arith.mulf %361, %314 : vector<2x32xf32>
    %365 = arith.mulf %360, %362 : vector<2x32xf32>
    %366 = arith.addf %364, %365 : vector<2x32xf32>
    %367 = math.tanh %366 : vector<2x32xf32>
    %368 = arith.mulf %363, %367 : vector<2x32xf32>
    %369 = vector.extract_strided_slice %351 {offsets = [0, 128], sizes = [2, 128], strides = [1, 1]} : vector<2x256xf32> to vector<2x128xf32>
    %370 = arith.addf %369, %4 : vector<2x128xf32>
    %371 = arith.negf %370 : vector<2x128xf32>
    %372 = math.exp %371 : vector<2x128xf32>
    %cst_42 = arith.constant 1.000000e+00 : f32
    %373 = vector.broadcast %cst_42 : f32 to vector<2x128xf32>
    %374 = arith.addf %373, %372 : vector<2x128xf32>
    %375 = arith.divf %373, %374 : vector<2x128xf32>
    %376 = math.tanh %370 : vector<2x128xf32>
    %377 = vector.extract_strided_slice %375 {offsets = [0, 0], sizes = [2, 32], strides = [1, 1]} : vector<2x128xf32> to vector<2x32xf32>
    %378 = vector.extract_strided_slice %375 {offsets = [0, 32], sizes = [2, 32], strides = [1, 1]} : vector<2x128xf32> to vector<2x32xf32>
    %379 = vector.extract_strided_slice %376 {offsets = [0, 64], sizes = [2, 32], strides = [1, 1]} : vector<2x128xf32> to vector<2x32xf32>
    %380 = vector.extract_strided_slice %375 {offsets = [0, 96], sizes = [2, 32], strides = [1, 1]} : vector<2x128xf32> to vector<2x32xf32>
    %381 = arith.mulf %378, %331 : vector<2x32xf32>
    %382 = arith.mulf %377, %379 : vector<2x32xf32>
    %383 = arith.addf %381, %382 : vector<2x32xf32>
    %384 = math.tanh %383 : vector<2x32xf32>
    %385 = arith.mulf %380, %384 : vector<2x32xf32>
    %386 = vector.broadcast %1 : vector<1x32xf32> to vector<2x32xf32>
    %387 = arith.mulf %385, %386 : vector<2x32xf32>
    %cst_43 = arith.constant dense<0.000000e+00> : vector<2xf32>
    %388 = vector.multi_reduction <add>, %387, %cst_43 [1] : vector<2x32xf32> to vector<2xf32>
    %389 = vector.shape_cast %388 : vector<2xf32> to vector<2x1xf32>
    %390 = arith.maximumf %338, %389 : vector<2x1xf32>
    %391 = arith.subf %338, %390 : vector<2x1xf32>
    %392 = math.exp %391 : vector<2x1xf32>
    %393 = arith.subf %389, %390 : vector<2x1xf32>
    %394 = math.exp %393 : vector<2x1xf32>
    %395 = arith.mulf %392, %344 : vector<2x1xf32>
    %396 = arith.addf %395, %394 : vector<2x1xf32>
    %397 = vector.broadcast %392 : vector<2x1xf32> to vector<2x32xf32>
    %398 = arith.mulf %397, %349 : vector<2x32xf32>
    %399 = vector.broadcast %394 : vector<2x1xf32> to vector<2x32xf32>
    %400 = arith.mulf %399, %385 : vector<2x32xf32>
    %401 = arith.addf %398, %400 : vector<2x32xf32>
    %402 = tpu.concatenate %368, %385 in 1 : vector<2x32xf32>, vector<2x32xf32> -> vector<2x64xf32>
    %cst_44 = arith.constant dense<0.000000e+00> : vector<2x256xf32>
    %403 = tpu.matmul %402, %0, %cst_44 {dimension_numbers = #tpu.dot_dimension_numbers<[1], [0], [0], [1], [0, 0, 1, 1], [], []>} : vector<2x64xf32>, vector<64x256xf32>, vector<2x256xf32> -> vector<2x256xf32>
    %404 = vector.extract_strided_slice %403 {offsets = [0, 128], sizes = [2, 128], strides = [1, 1]} : vector<2x256xf32> to vector<2x128xf32>
    %405 = arith.addf %404, %4 : vector<2x128xf32>
    %406 = arith.negf %405 : vector<2x128xf32>
    %407 = math.exp %406 : vector<2x128xf32>
    %cst_45 = arith.constant 1.000000e+00 : f32
    %408 = vector.broadcast %cst_45 : f32 to vector<2x128xf32>
    %409 = arith.addf %408, %407 : vector<2x128xf32>
    %410 = arith.divf %408, %409 : vector<2x128xf32>
    %411 = math.tanh %405 : vector<2x128xf32>
    %412 = vector.extract_strided_slice %410 {offsets = [0, 0], sizes = [2, 32], strides = [1, 1]} : vector<2x128xf32> to vector<2x32xf32>
    %413 = vector.extract_strided_slice %410 {offsets = [0, 32], sizes = [2, 32], strides = [1, 1]} : vector<2x128xf32> to vector<2x32xf32>
    %414 = vector.extract_strided_slice %411 {offsets = [0, 64], sizes = [2, 32], strides = [1, 1]} : vector<2x128xf32> to vector<2x32xf32>
    %415 = vector.extract_strided_slice %410 {offsets = [0, 96], sizes = [2, 32], strides = [1, 1]} : vector<2x128xf32> to vector<2x32xf32>
    %416 = arith.mulf %413, %383 : vector<2x32xf32>
    %417 = arith.mulf %412, %414 : vector<2x32xf32>
    %418 = arith.addf %416, %417 : vector<2x32xf32>
    %419 = math.tanh %418 : vector<2x32xf32>
    %420 = arith.mulf %415, %419 : vector<2x32xf32>
    %421 = vector.broadcast %1 : vector<1x32xf32> to vector<2x32xf32>
    %422 = arith.mulf %420, %421 : vector<2x32xf32>
    %cst_46 = arith.constant dense<0.000000e+00> : vector<2xf32>
    %423 = vector.multi_reduction <add>, %422, %cst_46 [1] : vector<2x32xf32> to vector<2xf32>
    %424 = vector.shape_cast %423 : vector<2xf32> to vector<2x1xf32>
    %425 = arith.maximumf %390, %424 : vector<2x1xf32>
    %426 = arith.subf %390, %425 : vector<2x1xf32>
    %427 = math.exp %426 : vector<2x1xf32>
    %428 = arith.subf %424, %425 : vector<2x1xf32>
    %429 = math.exp %428 : vector<2x1xf32>
    %430 = arith.mulf %427, %396 : vector<2x1xf32>
    %431 = arith.addf %430, %429 : vector<2x1xf32>
    %432 = vector.broadcast %427 : vector<2x1xf32> to vector<2x32xf32>
    %433 = arith.mulf %432, %401 : vector<2x32xf32>
    %434 = vector.broadcast %429 : vector<2x1xf32> to vector<2x32xf32>
    %435 = arith.mulf %434, %420 : vector<2x32xf32>
    %436 = arith.addf %433, %435 : vector<2x32xf32>
    %437 = vector.broadcast %431 : vector<2x1xf32> to vector<2x32xf32>
    %438 = arith.divf %436, %437 : vector<2x32xf32>
    %c0_47 = arith.constant 0 : index
    %c0_48 = arith.constant 0 : index
    %439 = vector.load %arg6[%c0_47, %c0_48] : memref<32x4xf32, #tpu.memory_space<vmem>>, vector<32x4xf32>
    %cst_49 = arith.constant dense<0.000000e+00> : vector<2x4xf32>
    %440 = tpu.matmul %438, %439, %cst_49 {dimension_numbers = #tpu.dot_dimension_numbers<[1], [0], [0], [1], [0, 0, 1, 1], [], []>} : vector<2x32xf32>, vector<32x4xf32>, vector<2x4xf32> -> vector<2x4xf32>
    %c0_50 = arith.constant 0 : index
    %c0_51 = arith.constant 0 : index
    %441 = vector.load %arg7[%c0_50, %c0_51] : memref<1x4xf32, #tpu.memory_space<vmem>>, vector<1x4xf32>
    %442 = vector.broadcast %441 : vector<1x4xf32> to vector<2x4xf32>
    %443 = arith.addf %440, %442 : vector<2x4xf32>
    %c0_52 = arith.constant 0 : index
    %c0_53 = arith.constant 0 : index
    %444 = vector.load %arg8[%c0_52, %c0_53] : memref<2x4xf32, #tpu.memory_space<vmem>>, vector<2x4xf32>
    tpu.vector_store %arg8[%c0_52, %c0_53], %443 {strides = array<i32>} : memref<2x4xf32, #tpu.memory_space<vmem>>, vector<2x4xf32>,
    return
  }
}

</mosaic_0001>

<llo_original>
// kernel: tpu_custom_call.1
$region0: #{tpu_custom_call.1}
  #allocation0 [shape = 'u32[]', space=smem, size = 0x4, offset = 0x4, fixed_abs, tag = 'smem constant byte address 0x4 - core index']
  #allocation1 [shape = 'u32[72,128]{1,0:T(1,128)}', space=vmem, size = 0x9000, scoped, tag = 'internal scratch']
  %s0 = inlined_call_operand.vmem [shape: f32[16,16], index: 0, kind: input, shape index: {}]
  %s1 = inlined_call_operand.vmem [shape: f32[16,128], index: 1, kind: input, shape index: {}]
  %s2 = inlined_call_operand.vmem [shape: f32[1,128], index: 2, kind: input, shape index: {}]
  %s3 = inlined_call_operand.hbm [shape: f32[64,256], index: 3, kind: input, shape index: {}]
  %s4 = inlined_call_operand.vmem [shape: f32[1,128], index: 4, kind: input, shape index: {}]
  %s5 = inlined_call_operand.vmem [shape: f32[1,32], index: 5, kind: input, shape index: {}]
  %s6 = inlined_call_operand.vmem [shape: f32[32,4], index: 6, kind: input, shape index: {}]
  %s7 = inlined_call_operand.vmem [shape: f32[1,4], index: 7, kind: input, shape index: {}]
  %s8 = inlined_call_operand.hbm [shape: f32[2,4], index: 8, kind: output, shape index: {}]
  %s9 = sld [smem:[#allocation0]]
  $region46: #{tpu_custom_call.1} parent=0
    _
  %s11 = ssub.s32 1, %s9
  %s12 = scalar_select 0, %s11, %s9
  $region1: #{tpu_custom_call.1} parent=0
    #allocation2 [shape = 'u8[65536]{0}', space=vmem, size = 0x10000, scoped, tag = 'input window, operand 3, single buffered']
    #allocation3 [shape = 's32[1]{0}', space=sflag, size = 0x4, scoped, tag = 'scoped memory for tpu_custom_call.1']
    #allocation4 [shape = 's32[1]{0}', space=sflag, size = 0x4, scoped, tag = 'scoped memory for tpu_custom_call.1']
    #allocation5 [shape = 'u8[1024]{0}', space=vmem, size = 0x400, scoped, tag = 'output window, operand 0, single buffered']
    %13 = vsyncpa [#allocation3], 0
    %14 = vsyncpa [#allocation4], 0
    // Predicated region
    $region2: #{tpu_custom_call.1} parent=1 // pred_check
      _
    $region3: #{tpu_custom_call.1} parent=1 // pred_check_branch
      %16 = sbr.rel (0) target = $region5
    $region4: #{tpu_custom_call.1} parent=1 // pred_region
      _
    $region5: #{tpu_custom_call.1} parent=1 // pred_fallthru
      _
    // Predicated region
    $region6: #{tpu_custom_call.1} parent=1 // pred_check
      _
    $region7: #{tpu_custom_call.1} parent=1 // pred_check_branch
      %18 = sbr.rel (0) target = $region9
    $region8: #{tpu_custom_call.1} parent=1 // pred_region
      _
    $region9: #{tpu_custom_call.1} parent=1 // pred_fallthru
      _
    // Predicated region
    $region10: #{tpu_custom_call.1} parent=1 // pred_check
      _
    $region11: #{tpu_custom_call.1} parent=1 // pred_check_branch
      %20 = sbr.rel (0) target = $region13
    $region12: #{tpu_custom_call.1} parent=1 // pred_region
      _
    $region13: #{tpu_custom_call.1} parent=1 // pred_fallthru
      _
    // Predicated region
    $region14: #{tpu_custom_call.1} parent=1 // pred_check
      _
    $region15: #{tpu_custom_call.1} parent=1 // pred_check_branch
      %22 = sbr.rel (0) target = $region17
    $region16: #{tpu_custom_call.1} parent=1 // pred_region
      %24 = vsyncadd [#allocation3], 0
      %s25 = sshll.u32 %s3, 4
      %s26 = int_to_ptr.hbm [resolvable:$true] %s25
      %s27 = sshll.u32 [#allocation2], 4
      %s28 = int_to_ptr.vmem [resolvable:$true] %s27
      %33 = dma.hbm_to_vmem [thread:$0]  %s26, 2048, %s28, [#allocation3], 256, 256, 16
    $region17: #{tpu_custom_call.1} parent=1 // pred_fallthru
      _
    // Predicated region
    $region18: #{tpu_custom_call.1} parent=1 // pred_check
      _
    $region19: #{tpu_custom_call.1} parent=1 // pred_check_branch
      %35 = sbr.rel (0) target = $region21
    $region20: #{tpu_custom_call.1} parent=1 // pred_region
      _
    $region21: #{tpu_custom_call.1} parent=1 // pred_fallthru
      _
    // Predicated region
    $region22: #{tpu_custom_call.1} parent=1 // pred_check
      _
    $region23: #{tpu_custom_call.1} parent=1 // pred_check_branch
      %37 = sbr.rel (0) target = $region25
    $region24: #{tpu_custom_call.1} parent=1 // pred_region
      _
    $region25: #{tpu_custom_call.1} parent=1 // pred_fallthru
      _
    // Predicated region
    $region26: #{tpu_custom_call.1} parent=1 // pred_check
      _
    $region27: #{tpu_custom_call.1} parent=1 // pred_check_branch
      %39 = sbr.rel (0) target = $region29
    $region28: #{tpu_custom_call.1} parent=1 // pred_region
      _
    $region29: #{tpu_custom_call.1} parent=1 // pred_fallthru
      _
    // Predicated region
    $region30: #{tpu_custom_call.1} parent=1 // pred_check
      _
    $region31: #{tpu_custom_call.1} parent=1 // pred_check_branch
      %41 = sbr.rel (0) target = $region33
    $region32: #{tpu_custom_call.1} parent=1 // pred_region
      _
    $region33: #{tpu_custom_call.1} parent=1 // pred_fallthru
      _
    // Predicated region
    $region34: #{tpu_custom_call.1} parent=1 // pred_check
      _
    $region35: #{tpu_custom_call.1} parent=1 // pred_check_branch
      %43 = sbr.rel (0) target = $region37
    $region36: #{tpu_custom_call.1} parent=1 // pred_region
      %45 = dma.done [#allocation3], 2048
    $region37: #{tpu_custom_call.1} parent=1 // pred_fallthru
      _
    %v46 = vld [vmem:[#allocation2] sm:$0xff]
    %v47 = vld [vmem:[#allocation2 + $0x8] sm:$0xff]
    %v48 = vld [vmem:[#allocation2 + $0x10] sm:$0xff]
    %v49 = vld [vmem:[#allocation2 + $0x18] sm:$0xff]
    %v50 = vld [vmem:[#allocation2 + $0x20] sm:$0xff]
    %v51 = vld [vmem:[#allocation2 + $0x28] sm:$0xff]
    %v52 = vld [vmem:[#allocation2 + $0x30] sm:$0xff]
    %v53 = vld [vmem:[#allocation2 + $0x38] sm:$0xff]
    %v54 = vld [vmem:[#allocation2 + $0x40] sm:$0xff]
    %v55 = vld [vmem:[#allocation2 + $0x48] sm:$0xff]
    %v56 = vld [vmem:[#allocation2 + $0x50] sm:$0xff]
    %v57 = vld [vmem:[#allocation2 + $0x58] sm:$0xff]
    %v58 = vld [vmem:[#allocation2 + $0x60] sm:$0xff]
    %v59 = vld [vmem:[#allocation2 + $0x68] sm:$0xff]
    %v60 = vld [vmem:[#allocation2 + $0x70] sm:$0xff]
    %v61 = vld [vmem:[#allocation2 + $0x78] sm:$0xff]
    %v62 = vld [vmem:[%s5] sm:$0x1]
    %v63 = vld [vmem:[%s4] sm:$0x1]
    %v65 = vperm.slane %v63, 0
    %v67 = vld [vmem:[%s0] sm:$0xff]
    %v68 = vld [vmem:[%s0 + $0x8] sm:$0xff]
    %v69 = vld [vmem:[%s1] sm:$0xff]
    %v70 = vld [vmem:[%s1 + $0x8] sm:$0xff]
    %v71 = vld [vmem:[%s2] sm:$0x1]
    %v73 = vperm.slane %v71, 0
    %vm75 = vcmask 130048
    %v77 = vsel %vm75, %v67, 0
    %v80 = vsel %vm75, %v68, 0
    %82 = vmatpush.msra.mxu0 0.0
    %83 = vmatpush.msra.mxu0 0.0
    %84 = vmatpush.msra.mxu0 0.0
    %85 = vmatpush.msra.mxu0 0.0
    %86 = vmatpush.msra.mxu0 0.0
    %87 = vmatpush.msra.mxu0 0.0
    %88 = vmatpush.msra.mxu0 0.0
    %89 = vmatpush.msra.mxu0 0.0
    %90 = vmatpush.msra.mxu0 0.0
    %91 = vmatpush.msra.mxu0 0.0
    %92 = vmatpush.msra.mxu0 0.0
    %93 = vmatpush.msra.mxu0 0.0
    %94 = vmatpush.msra.mxu0 0.0
    %95 = vmatpush.msra.mxu0 0.0
    %96 = vmatpush.msra.mxu0 %v70
    %97 = vmatpush.msra.mxu0 %v69
    %98 = vmatmul.f32.gmra.mxu0 %v77
    %v99 = vpop.f32.mrf.mxu0
    %v100 = vadd.f32 %v73, %v99
    %101 = vmatmul.f32.gmra.mxu0 %v80
    %v102 = vpop.f32.mrf.mxu0
    %v103 = vadd.f32 %v73, %v102
    %104 = vdwg.mxu0
    %v105 = vxor.u32 %v100, 2147483648
    %v106 = vmul.f32 %v105, 1.442695
    %v107 = vpow.pop %v106
    %v108 = vadd.f32 %v107, 1.0
    %v109 = vrcp.pop %v108
    %v110 = vmul.f32 %v108, %v109
    %v111 = vsub.f32 1.0, %v110
    %v112 = vmul.f32 %v109, %v111
    %v113 = vadd.f32 %v109, %v112
    %vm114 = vweird.f32 %v108
    %vm115 = vweird.f32 %v109
    %vm116 = vmor %vm114, %vm115
    %v117 = vsel %vm116, %v109, %v113
    %v118 = vand.u32 2147483647, %v108
    %vm119 = vcmp.eq.f32.partialorder %v118, 8.507059e+37
    %v120 = vand.u32 %v108, 2147483648
    %v121 = vor.u32 1.1754944e-38, %v120
    %v122 = vsel %vm119, %v121, %v117
    %v123 = vmul.f32 1.0, %v122
    %v124 = vtanh.pop %v100
    %v125 = vmul.f32 %v123, 0.0
    %127 = vrot.lane.b32.xlu0 %v124, 64
    %v128 = vpop.permute.xlu0 %127
    %v130 = vmul.f32 %v123, %v128
    %132 = vrot.lane.b32.xlu0 %v130, 32
    %v133 = vpop.permute.xlu0 %132
    %v135 = vadd.f32 %v125, %v133
    %v136 = vtanh.pop %v135
    %138 = vrot.lane.b32.xlu0 %v136, 64
    %v139 = vpop.permute.xlu0 %138
    %v141 = vmul.f32 %v123, %v139
    %143 = vrot.lane.b32.xlu0 %v141, 32
    %v144 = vpop.permute.xlu0 %143
    %vm146 = vcmask 261120
    %v147 = vsel %vm146, %v144, 0.0
    %vm148 = vcmask 523264
    %v150 = vsel %vm148, %v147, 0
    %152 = vmatpush.msra.mxu0 0.0
    %153 = vmatpush.msra.mxu0 0.0
    %154 = vmatpush.msra.mxu0 0.0
    %155 = vmatpush.msra.mxu0 0.0
    %156 = vmatpush.msra.mxu0 0.0
    %157 = vmatpush.msra.mxu0 0.0
    %158 = vmatpush.msra.mxu0 0.0
    %159 = vmatpush.msra.mxu0 0.0
    %160 = vmatpush.msra.mxu0 %v60
    %161 = vmatpush.msra.mxu0 %v58
    %162 = vmatpush.msra.mxu0 %v56
    %163 = vmatpush.msra.mxu0 %v54
    %164 = vmatpush.msra.mxu0 %v52
    %165 = vmatpush.msra.mxu0 %v50
    %166 = vmatpush.msra.mxu0 %v48
    %167 = vmatpush.msra.mxu0 %v46
    %168 = vmatmul.f32.gmra.mxu0 %v150
    %v169 = vpop.f32.mrf.mxu0
    %v170 = vadd.f32 0.0, %v169
    %171 = vdwg.mxu0
    %172 = vmatpush.msra.mxu0 0.0
    %173 = vmatpush.msra.mxu0 0.0
    %174 = vmatpush.msra.mxu0 0.0
    %175 = vmatpush.msra.mxu0 0.0
    %176 = vmatpush.msra.mxu0 0.0
    %177 = vmatpush.msra.mxu0 0.0
    %178 = vmatpush.msra.mxu0 0.0
    %179 = vmatpush.msra.mxu0 0.0
    %180 = vmatpush.msra.mxu0 %v61
    %181 = vmatpush.msra.mxu0 %v59
    %182 = vmatpush.msra.mxu0 %v57
    %183 = vmatpush.msra.mxu0 %v55
    %184 = vmatpush.msra.mxu0 %v53
    %185 = vmatpush.msra.mxu0 %v51
    %186 = vmatpush.msra.mxu0 %v49
    %187 = vmatpush.msra.mxu0 %v47
    %188 = vmatmul.f32.gmra.mxu0 %v150
    %v189 = vpop.f32.mrf.mxu0
    %v190 = vadd.f32 0.0, %v189
    %191 = vdwg.mxu0
    %v193 = vrot.slane %v170, 6
    %v195 = vadd.f32 %v100, %v193
    %v196 = vxor.u32 %v195, 2147483648
    %v197 = vmul.f32 %v196, 1.442695
    %v198 = vpow.pop %v197
    %v199 = vadd.f32 %v198, 1.0
    %v200 = vrcp.pop %v199
    %v201 = vmul.f32 %v199, %v200
    %v202 = vsub.f32 1.0, %v201
    %v203 = vmul.f32 %v200, %v202
    %v204 = vadd.f32 %v200, %v203
    %vm205 = vweird.f32 %v199
    %vm206 = vweird.f32 %v200
    %vm207 = vmor %vm205, %vm206
    %v208 = vsel %vm207, %v200, %v204
    %v209 = vand.u32 2147483647, %v199
    %vm210 = vcmp.eq.f32.partialorder %v209, 8.507059e+37
    %v211 = vand.u32 %v199, 2147483648
    %v212 = vor.u32 1.1754944e-38, %v211
    %v213 = vsel %vm210, %v212, %v208
    %v214 = vmul.f32 1.0, %v213
    %v215 = vtanh.pop %v195
    %v217 = vrot.slane %v135, 6
    %v219 = vmul.f32 %v214, %v217
    %221 = vrot.lane.b32.xlu0 %v215, 64
    %v222 = vpop.permute.xlu0 %221
    %v224 = vmul.f32 %v214, %v222
    %226 = vrot.lane.b32.xlu0 %v224, 32
    %v227 = vpop.permute.xlu0 %226
    %v229 = vadd.f32 %v219, %v227
    %v230 = vtanh.pop %v229
    %232 = vrot.lane.b32.xlu0 %v230, 64
    %v233 = vpop.permute.xlu0 %232
    %v235 = vmul.f32 %v214, %v233
    %v236 = vadd.f32 %v190, %v65
    %v237 = vxor.u32 %v236, 2147483648
    %v238 = vmul.f32 %v237, 1.442695
    %v239 = vpow.pop %v238
    %v240 = vadd.f32 %v239, 1.0
    %v241 = vrcp.pop %v240
    %v242 = vmul.f32 %v240, %v241
    %v243 = vsub.f32 1.0, %v242
    %v244 = vmul.f32 %v241, %v243
    %v245 = vadd.f32 %v241, %v244
    %vm246 = vweird.f32 %v240
    %vm247 = vweird.f32 %v241
    %vm248 = vmor %vm246, %vm247
    %v249 = vsel %vm248, %v241, %v245
    %v250 = vand.u32 2147483647, %v240
    %vm251 = vcmp.eq.f32.partialorder %v250, 8.507059e+37
    %v252 = vand.u32 %v240, 2147483648
    %v253 = vor.u32 1.1754944e-38, %v252
    %v254 = vsel %vm251, %v253, %v249
    %v255 = vmul.f32 1.0, %v254
    %v256 = vtanh.pop %v236
    %v257 = vmul.f32 %v255, 0.0
    %259 = vrot.lane.b32.xlu0 %v256, 64
    %v260 = vpop.permute.xlu0 %259
    %v262 = vmul.f32 %v255, %v260
    %264 = vrot.lane.b32.xlu0 %v262, 32
    %v265 = vpop.permute.xlu0 %264
    %v267 = vadd.f32 %v257, %v265
    %v268 = vtanh.pop %v267
    %270 = vrot.lane.b32.xlu0 %v268, 64
    %v271 = vpop.permute.xlu0 %270
    %v273 = vmul.f32 %v255, %v271
    %v275 = vperm.slane %v62, 0
    %276 = vrot.lane.b32.xlu0 %v275, 96
    %v277 = vpop.permute.xlu0 %276
    %v279 = vmul.f32 %v273, %v277
    %281 = vrot.lane.b32.xlu0 %v279, 32
    %v282 = vpop.permute.xlu0 %281
    %vm284 = vcmask 254976
    %v285 = vsel %vm284, %v282, 0.0
    %286 = vadd.xlane.f32.xlu0 %v285
    %v287 = vpop.xlane.xlu0 %286
    %v288 = vsub.f32 -inf, %v287
    %v289 = vmul.f32 %v288, 1.442695
    %v290 = vpow.pop %v289
    %v291 = vsub.f32 %v287, %v287
    %v292 = vmul.f32 %v291, 1.442695
    %v293 = vpow.pop %v292
    %v294 = vmul.f32 %v290, 0.0
    %v295 = vadd.f32 %v294, %v293
    %v296 = vmul.f32 %v293, %v273
    %v297 = vadd.f32 %v294, %v296
    %299 = vrot.lane.b32.xlu0 %v235, 32
    %v300 = vpop.permute.xlu0 %299
    %v303 = vrot.slane %v273, 6
    %304 = vrot.lane.b32.xlu0 %v303, 64
    %v305 = vpop.permute.xlu0 %304
    %v307 = vsel %vm146, %v300, %v305
    %v309 = vrot.slane %v307, 2
    %v310 = vsel %vm148, %v309, 0
    %312 = vmatpush.msra.mxu0 0.0
    %313 = vmatpush.msra.mxu0 0.0
    %314 = vmatpush.msra.mxu0 0.0
    %315 = vmatpush.msra.mxu0 0.0
    %316 = vmatpush.msra.mxu0 0.0
    %317 = vmatpush.msra.mxu0 0.0
    %318 = vmatpush.msra.mxu0 0.0
    %319 = vmatpush.msra.mxu0 0.0
    %320 = vmatpush.msra.mxu0 %v60
    %321 = vmatpush.msra.mxu0 %v58
    %322 = vmatpush.msra.mxu0 %v56
    %323 = vmatpush.msra.mxu0 %v54
    %324 = vmatpush.msra.mxu0 %v52
    %325 = vmatpush.msra.mxu0 %v50
    %326 = vmatpush.msra.mxu0 %v48
    %327 = vmatpush.msra.mxu0 %v46
    %328 = vmatmul.f32.gmra.mxu0 %v310
    %v329 = vpop.f32.mrf.mxu0
    %v330 = vadd.f32 0.0, %v329
    %331 = vdwg.mxu0
    %332 = vmatpush.msra.mxu0 0.0
    %333 = vmatpush.msra.mxu0 0.0
    %334 = vmatpush.msra.mxu0 0.0
    %335 = vmatpush.msra.mxu0 0.0
    %336 = vmatpush.msra.mxu0 0.0
    %337 = vmatpush.msra.mxu0 0.0
    %338 = vmatpush.msra.mxu0 0.0
    %339 = vmatpush.msra.mxu0 0.0
    %340 = vmatpush.msra.mxu0 %v61
    %341 = vmatpush.msra.mxu0 %v59
    %342 = vmatpush.msra.mxu0 %v57
    %343 = vmatpush.msra.mxu0 %v55
    %344 = vmatpush.msra.mxu0 %v53
    %345 = vmatpush.msra.mxu0 %v51
    %346 = vmatpush.msra.mxu0 %v49
    %347 = vmatpush.msra.mxu0 %v47
    %348 = vmatmul.f32.gmra.mxu0 %v310
    %v349 = vpop.f32.mrf.mxu0
    %v350 = vadd.f32 0.0, %v349
    %351 = vdwg.mxu0
    %v353 = vrot.slane %v330, 4
    %v355 = vadd.f32 %v100, %v353
    %v356 = vxor.u32 %v355, 2147483648
    %v357 = vmul.f32 %v356, 1.442695
    %v358 = vpow.pop %v357
    %v359 = vadd.f32 %v358, 1.0
    %v360 = vrcp.pop %v359
    %v361 = vmul.f32 %v359, %v360
    %v362 = vsub.f32 1.0, %v361
    %v363 = vmul.f32 %v360, %v362
    %v364 = vadd.f32 %v360, %v363
    %vm365 = vweird.f32 %v359
    %vm366 = vweird.f32 %v360
    %vm367 = vmor %vm365, %vm366
    %v368 = vsel %vm367, %v360, %v364
    %v369 = vand.u32 2147483647, %v359
    %vm370 = vcmp.eq.f32.partialorder %v369, 8.507059e+37
    %v371 = vand.u32 %v359, 2147483648
    %v372 = vor.u32 1.1754944e-38, %v371
    %v373 = vsel %vm370, %v372, %v368
    %v374 = vmul.f32 1.0, %v373
    %v375 = vtanh.pop %v355
    %v377 = vrot.slane %v229, 6
    %v379 = vmul.f32 %v374, %v377
    %381 = vrot.lane.b32.xlu0 %v375, 64
    %v382 = vpop.permute.xlu0 %381
    %v384 = vmul.f32 %v374, %v382
    %386 = vrot.lane.b32.xlu0 %v384, 32
    %v387 = vpop.permute.xlu0 %386
    %v389 = vadd.f32 %v379, %v387
    %v390 = vtanh.pop %v389
    %392 = vrot.lane.b32.xlu0 %v390, 64
    %v393 = vpop.permute.xlu0 %392
    %v395 = vmul.f32 %v374, %v393
    %v396 = vadd.f32 %v350, %v65
    %v397 = vxor.u32 %v396, 2147483648
    %v398 = vmul.f32 %v397, 1.442695
    %v399 = vpow.pop %v398
    %v400 = vadd.f32 %v399, 1.0
    %v401 = vrcp.pop %v400
    %v402 = vmul.f32 %v400, %v401
    %v403 = vsub.f32 1.0, %v402
    %v404 = vmul.f32 %v401, %v403
    %v405 = vadd.f32 %v401, %v404
    %vm406 = vweird.f32 %v400
    %vm407 = vweird.f32 %v401
    %vm408 = vmor %vm406, %vm407
    %v409 = vsel %vm408, %v401, %v405
    %v410 = vand.u32 2147483647, %v400
    %vm411 = vcmp.eq.f32.partialorder %v410, 8.507059e+37
    %v412 = vand.u32 %v400, 2147483648
    %v413 = vor.u32 1.1754944e-38, %v412
    %v414 = vsel %vm411, %v413, %v409
    %v415 = vmul.f32 1.0, %v414
    %v416 = vtanh.pop %v396
    %v417 = vmul.f32 %v415, %v267
    %419 = vrot.lane.b32.xlu0 %v416, 64
    %v420 = vpop.permute.xlu0 %419
    %v422 = vmul.f32 %v415, %v420
    %424 = vrot.lane.b32.xlu0 %v422, 32
    %v425 = vpop.permute.xlu0 %424
    %v427 = vadd.f32 %v417, %v425
    %v428 = vtanh.pop %v427
    %430 = vrot.lane.b32.xlu0 %v428, 64
    %v431 = vpop.permute.xlu0 %430
    %v433 = vmul.f32 %v415, %v431
    %v434 = vmul.f32 %v433, %v277
    %436 = vrot.lane.b32.xlu0 %v434, 32
    %v437 = vpop.permute.xlu0 %436
    %v439 = vsel %vm284, %v437, 0.0
    %440 = vadd.xlane.f32.xlu0 %v439
    %v441 = vpop.xlane.xlu0 %440
    %v442 = vmax.f32 %v287, %v441
    %v443 = vsub.f32 %v287, %v442
    %v444 = vmul.f32 %v443, 1.442695
    %v445 = vpow.pop %v444
    %v446 = vsub.f32 %v441, %v442
    %v447 = vmul.f32 %v446, 1.442695
    %v448 = vpow.pop %v447
    %v449 = vmul.f32 %v445, %v295
    %v450 = vadd.f32 %v449, %v448
    %v451 = vmul.f32 %v445, %v297
    %v452 = vmul.f32 %v448, %v433
    %v453 = vadd.f32 %v451, %v452
    %455 = vrot.lane.b32.xlu0 %v395, 32
    %v456 = vpop.permute.xlu0 %455
    %v459 = vrot.slane %v433, 4
    %460 = vrot.lane.b32.xlu0 %v459, 64
    %v461 = vpop.permute.xlu0 %460
    %v463 = vsel %vm146, %v456, %v461
    %v465 = vrot.slane %v463, 4
    %v466 = vsel %vm148, %v465, 0
    %468 = vmatpush.msra.mxu0 0.0
    %469 = vmatpush.msra.mxu0 0.0
    %470 = vmatpush.msra.mxu0 0.0
    %471 = vmatpush.msra.mxu0 0.0
    %472 = vmatpush.msra.mxu0 0.0
    %473 = vmatpush.msra.mxu0 0.0
    %474 = vmatpush.msra.mxu0 0.0
    %475 = vmatpush.msra.mxu0 0.0
    %476 = vmatpush.msra.mxu0 %v60
    %477 = vmatpush.msra.mxu0 %v58
    %478 = vmatpush.msra.mxu0 %v56
    %479 = vmatpush.msra.mxu0 %v54
    %480 = vmatpush.msra.mxu0 %v52
    %481 = vmatpush.msra.mxu0 %v50
    %482 = vmatpush.msra.mxu0 %v48
    %483 = vmatpush.msra.mxu0 %v46
    %484 = vmatmul.f32.gmra.mxu0 %v466
    %v485 = vpop.f32.mrf.mxu0
    %v486 = vadd.f32 0.0, %v485
    %487 = vdwg.mxu0
    %488 = vmatpush.msra.mxu0 0.0
    %489 = vmatpush.msra.mxu0 0.0
    %490 = vmatpush.msra.mxu0 0.0
    %491 = vmatpush.msra.mxu0 0.0
    %492 = vmatpush.msra.mxu0 0.0
    %493 = vmatpush.msra.mxu0 0.0
    %494 = vmatpush.msra.mxu0 0.0
    %495 = vmatpush.msra.mxu0 0.0
    %496 = vmatpush.msra.mxu0 %v61
    %497 = vmatpush.msra.mxu0 %v59
    %498 = vmatpush.msra.mxu0 %v57
    %499 = vmatpush.msra.mxu0 %v55
    %500 = vmatpush.msra.mxu0 %v53
    %501 = vmatpush.msra.mxu0 %v51
    %502 = vmatpush.msra.mxu0 %v49
    %503 = vmatpush.msra.mxu0 %v47
    %504 = vmatmul.f32.gmra.mxu0 %v466
    %v505 = vpop.f32.mrf.mxu0
    %v506 = vadd.f32 0.0, %v505
    %507 = vdwg.mxu0
    %v509 = vrot.slane %v486, 2
    %v511 = vadd.f32 %v100, %v509
    %v512 = vxor.u32 %v511, 2147483648
    %v513 = vmul.f32 %v512, 1.442695
    %v514 = vpow.pop %v513
    %v515 = vadd.f32 %v514, 1.0
    %v516 = vrcp.pop %v515
    %v517 = vmul.f32 %v515, %v516
    %v518 = vsub.f32 1.0, %v517
    %v519 = vmul.f32 %v516, %v518
    %v520 = vadd.f32 %v516, %v519
    %vm521 = vweird.f32 %v515
    %vm522 = vweird.f32 %v516
    %vm523 = vmor %vm521, %vm522
    %v524 = vsel %vm523, %v516, %v520
    %v525 = vand.u32 2147483647, %v515
    %vm526 = vcmp.eq.f32.partialorder %v525, 8.507059e+37
    %v527 = vand.u32 %v515, 2147483648
    %v528 = vor.u32 1.1754944e-38, %v527
    %v529 = vsel %vm526, %v528, %v524
    %v530 = vmul.f32 1.0, %v529
    %v531 = vtanh.pop %v511
    %v533 = vrot.slane %v389, 6
    %v535 = vmul.f32 %v530, %v533
    %537 = vrot.lane.b32.xlu0 %v531, 64
    %v538 = vpop.permute.xlu0 %537
    %v540 = vmul.f32 %v530, %v538
    %542 = vrot.lane.b32.xlu0 %v540, 32
    %v543 = vpop.permute.xlu0 %542
    %v545 = vadd.f32 %v535, %v543
    %v546 = vtanh.pop %v545
    %548 = vrot.lane.b32.xlu0 %v546, 64
    %v549 = vpop.permute.xlu0 %548
    %v551 = vmul.f32 %v530, %v549
    %v552 = vadd.f32 %v506, %v65
    %v553 = vxor.u32 %v552, 2147483648
    %v554 = vmul.f32 %v553, 1.442695
    %v555 = vpow.pop %v554
    %v556 = vadd.f32 %v555, 1.0
    %v557 = vrcp.pop %v556
    %v558 = vmul.f32 %v556, %v557
    %v559 = vsub.f32 1.0, %v558
    %v560 = vmul.f32 %v557, %v559
    %v561 = vadd.f32 %v557, %v560
    %vm562 = vweird.f32 %v556
    %vm563 = vweird.f32 %v557
    %vm564 = vmor %vm562, %vm563
    %v565 = vsel %vm564, %v557, %v561
    %v566 = vand.u32 2147483647, %v556
    %vm567 = vcmp.eq.f32.partialorder %v566, 8.507059e+37
    %v568 = vand.u32 %v556, 2147483648
    %v569 = vor.u32 1.1754944e-38, %v568
    %v570 = vsel %vm567, %v569, %v565
    %v571 = vmul.f32 1.0, %v570
    %v572 = vtanh.pop %v552
    %v573 = vmul.f32 %v571, %v427
    %575 = vrot.lane.b32.xlu0 %v572, 64
    %v576 = vpop.permute.xlu0 %575
    %v578 = vmul.f32 %v571, %v576
    %580 = vrot.lane.b32.xlu0 %v578, 32
    %v581 = vpop.permute.xlu0 %580
    %v583 = vadd.f32 %v573, %v581
    %v584 = vtanh.pop %v583
    %586 = vrot.lane.b32.xlu0 %v584, 64
    %v587 = vpop.permute.xlu0 %586
    %v589 = vmul.f32 %v571, %v587
    %v590 = vmul.f32 %v589, %v277
    %592 = vrot.lane.b32.xlu0 %v590, 32
    %v593 = vpop.permute.xlu0 %592
    %v595 = vsel %vm284, %v593, 0.0
    %596 = vadd.xlane.f32.xlu0 %v595
    %v597 = vpop.xlane.xlu0 %596
    %v598 = vmax.f32 %v442, %v597
    %v599 = vsub.f32 %v442, %v598
    %v600 = vmul.f32 %v599, 1.442695
    %v601 = vpow.pop %v600
    %v602 = vsub.f32 %v597, %v598
    %v603 = vmul.f32 %v602, 1.442695
    %v604 = vpow.pop %v603
    %v605 = vmul.f32 %v601, %v450
    %v606 = vadd.f32 %v605, %v604
    %v607 = vmul.f32 %v601, %v453
    %v608 = vmul.f32 %v604, %v589
    %v609 = vadd.f32 %v607, %v608
    %611 = vrot.lane.b32.xlu0 %v551, 32
    %v612 = vpop.permute.xlu0 %611
    %v615 = vrot.slane %v589, 2
    %616 = vrot.lane.b32.xlu0 %v615, 64
    %v617 = vpop.permute.xlu0 %616
    %v619 = vsel %vm146, %v612, %v617
    %v621 = vrot.slane %v619, 6
    %v622 = vsel %vm148, %v621, 0
    %624 = vmatpush.msra.mxu0 0.0
    %625 = vmatpush.msra.mxu0 0.0
    %626 = vmatpush.msra.mxu0 0.0
    %627 = vmatpush.msra.mxu0 0.0
    %628 = vmatpush.msra.mxu0 0.0
    %629 = vmatpush.msra.mxu0 0.0
    %630 = vmatpush.msra.mxu0 0.0
    %631 = vmatpush.msra.mxu0 0.0
    %632 = vmatpush.msra.mxu0 %v60
    %633 = vmatpush.msra.mxu0 %v58
    %634 = vmatpush.msra.mxu0 %v56
    %635 = vmatpush.msra.mxu0 %v54
    %636 = vmatpush.msra.mxu0 %v52
    %637 = vmatpush.msra.mxu0 %v50
    %638 = vmatpush.msra.mxu0 %v48
    %639 = vmatpush.msra.mxu0 %v46
    %640 = vmatmul.f32.gmra.mxu0 %v622
    %v641 = vpop.f32.mrf.mxu0
    %v642 = vadd.f32 0.0, %v641
    %643 = vdwg.mxu0
    %644 = vmatpush.msra.mxu0 0.0
    %645 = vmatpush.msra.mxu0 0.0
    %646 = vmatpush.msra.mxu0 0.0
    %647 = vmatpush.msra.mxu0 0.0
    %648 = vmatpush.msra.mxu0 0.0
    %649 = vmatpush.msra.mxu0 0.0
    %650 = vmatpush.msra.mxu0 0.0
    %651 = vmatpush.msra.mxu0 0.0
    %652 = vmatpush.msra.mxu0 %v61
    %653 = vmatpush.msra.mxu0 %v59
    %654 = vmatpush.msra.mxu0 %v57
    %655 = vmatpush.msra.mxu0 %v55
    %656 = vmatpush.msra.mxu0 %v53
    %657 = vmatpush.msra.mxu0 %v51
    %658 = vmatpush.msra.mxu0 %v49
    %659 = vmatpush.msra.mxu0 %v47
    %660 = vmatmul.f32.gmra.mxu0 %v622
    %v661 = vpop.f32.mrf.mxu0
    %v662 = vadd.f32 0.0, %v661
    %663 = vdwg.mxu0
    %v664 = vadd.f32 %v103, %v642
    %v665 = vxor.u32 %v664, 2147483648
    %v666 = vmul.f32 %v665, 1.442695
    %v667 = vpow.pop %v666
    %v668 = vadd.f32 %v667, 1.0
    %v669 = vrcp.pop %v668
    %v670 = vmul.f32 %v668, %v669
    %v671 = vsub.f32 1.0, %v670
    %v672 = vmul.f32 %v669, %v671
    %v673 = vadd.f32 %v669, %v672
    %vm674 = vweird.f32 %v668
    %vm675 = vweird.f32 %v669
    %vm676 = vmor %vm674, %vm675
    %v677 = vsel %vm676, %v669, %v673
    %v678 = vand.u32 2147483647, %v668
    %vm679 = vcmp.eq.f32.partialorder %v678, 8.507059e+37
    %v680 = vand.u32 %v668, 2147483648
    %v681 = vor.u32 1.1754944e-38, %v680
    %v682 = vsel %vm679, %v681, %v677
    %v683 = vmul.f32 1.0, %v682
    %v684 = vtanh.pop %v664
    %v686 = vrot.slane %v545, 6
    %v688 = vmul.f32 %v683, %v686
    %690 = vrot.lane.b32.xlu0 %v684, 64
    %v691 = vpop.permute.xlu0 %690
    %v693 = vmul.f32 %v683, %v691
    %695 = vrot.lane.b32.xlu0 %v693, 32
    %v696 = vpop.permute.xlu0 %695
    %v698 = vadd.f32 %v688, %v696
    %v699 = vtanh.pop %v698
    %701 = vrot.lane.b32.xlu0 %v699, 64
    %v702 = vpop.permute.xlu0 %701
    %v704 = vmul.f32 %v683, %v702
    %v705 = vadd.f32 %v662, %v65
    %v706 = vxor.u32 %v705, 2147483648
    %v707 = vmul.f32 %v706, 1.442695
    %v708 = vpow.pop %v707
    %v709 = vadd.f32 %v708, 1.0
    %v710 = vrcp.pop %v709
    %v711 = vmul.f32 %v709, %v710
    %v712 = vsub.f32 1.0, %v711
    %v713 = vmul.f32 %v710, %v712
    %v714 = vadd.f32 %v710, %v713
    %vm715 = vweird.f32 %v709
    %vm716 = vweird.f32 %v710
    %vm717 = vmor %vm715, %vm716
    %v718 = vsel %vm717, %v710, %v714
    %v719 = vand.u32 2147483647, %v709
    %vm720 = vcmp.eq.f32.partialorder %v719, 8.507059e+37
    %v721 = vand.u32 %v709, 2147483648
    %v722 = vor.u32 1.1754944e-38, %v721
    %v723 = vsel %vm720, %v722, %v718
    %v724 = vmul.f32 1.0, %v723
    %v725 = vtanh.pop %v705
    %v726 = vmul.f32 %v724, %v583
    %728 = vrot.lane.b32.xlu0 %v725, 64
    %v729 = vpop.permute.xlu0 %728
    %v731 = vmul.f32 %v724, %v729
    %733 = vrot.lane.b32.xlu0 %v731, 32
    %v734 = vpop.permute.xlu0 %733
    %v736 = vadd.f32 %v726, %v734
    %v737 = vtanh.pop %v736
    %739 = vrot.lane.b32.xlu0 %v737, 64
    %v740 = vpop.permute.xlu0 %739
    %v742 = vmul.f32 %v724, %v740
    %v743 = vmul.f32 %v742, %v277
    %745 = vrot.lane.b32.xlu0 %v743, 32
    %v746 = vpop.permute.xlu0 %745
    %v748 = vsel %vm284, %v746, 0.0
    %749 = vadd.xlane.f32.xlu0 %v748
    %v750 = vpop.xlane.xlu0 %749
    %v751 = vmax.f32 %v598, %v750
    %v752 = vsub.f32 %v598, %v751
    %v753 = vmul.f32 %v752, 1.442695
    %v754 = vpow.pop %v753
    %v755 = vsub.f32 %v750, %v751
    %v756 = vmul.f32 %v755, 1.442695
    %v757 = vpow.pop %v756
    %v758 = vmul.f32 %v754, %v606
    %v759 = vadd.f32 %v758, %v757
    %v760 = vmul.f32 %v754, %v609
    %v761 = vmul.f32 %v757, %v742
    %v762 = vadd.f32 %v760, %v761
    %764 = vrot.lane.b32.xlu0 %v704, 32
    %v765 = vpop.permute.xlu0 %764
    %768 = vrot.lane.b32.xlu0 %v742, 64
    %v769 = vpop.permute.xlu0 %768
    %v771 = vsel %vm146, %v765, %v769
    %v773 = vsel %vm148, %v771, 0
    %775 = vmatpush.msra.mxu0 0.0
    %776 = vmatpush.msra.mxu0 0.0
    %777 = vmatpush.msra.mxu0 0.0
    %778 = vmatpush.msra.mxu0 0.0
    %779 = vmatpush.msra.mxu0 0.0
    %780 = vmatpush.msra.mxu0 0.0
    %781 = vmatpush.msra.mxu0 0.0
    %782 = vmatpush.msra.mxu0 0.0
    %783 = vmatpush.msra.mxu0 %v60
    %784 = vmatpush.msra.mxu0 %v58
    %785 = vmatpush.msra.mxu0 %v56
    %786 = vmatpush.msra.mxu0 %v54
    %787 = vmatpush.msra.mxu0 %v52
    %788 = vmatpush.msra.mxu0 %v50
    %789 = vmatpush.msra.mxu0 %v48
    %790 = vmatpush.msra.mxu0 %v46
    %791 = vmatmul.f32.gmra.mxu0 %v773
    %v792 = vpop.f32.mrf.mxu0
    %v793 = vadd.f32 0.0, %v792
    %794 = vdwg.mxu0
    %795 = vmatpush.msra.mxu0 0.0
    %796 = vmatpush.msra.mxu0 0.0
    %797 = vmatpush.msra.mxu0 0.0
    %798 = vmatpush.msra.mxu0 0.0
    %799 = vmatpush.msra.mxu0 0.0
    %800 = vmatpush.msra.mxu0 0.0
    %801 = vmatpush.msra.mxu0 0.0
    %802 = vmatpush.msra.mxu0 0.0
    %803 = vmatpush.msra.mxu0 %v61
    %804 = vmatpush.msra.mxu0 %v59
    %805 = vmatpush.msra.mxu0 %v57
    %806 = vmatpush.msra.mxu0 %v55
    %807 = vmatpush.msra.mxu0 %v53
    %808 = vmatpush.msra.mxu0 %v51
    %809 = vmatpush.msra.mxu0 %v49
    %810 = vmatpush.msra.mxu0 %v47
    %811 = vmatmul.f32.gmra.mxu0 %v773
    %v812 = vpop.f32.mrf.mxu0
    %v813 = vadd.f32 0.0, %v812
    %814 = vdwg.mxu0
    %v816 = vrot.slane %v793, 6
    %v818 = vadd.f32 %v103, %v816
    %v819 = vxor.u32 %v818, 2147483648
    %v820 = vmul.f32 %v819, 1.442695
    %v821 = vpow.pop %v820
    %v822 = vadd.f32 %v821, 1.0
    %v823 = vrcp.pop %v822
    %v824 = vmul.f32 %v822, %v823
    %v825 = vsub.f32 1.0, %v824
    %v826 = vmul.f32 %v823, %v825
    %v827 = vadd.f32 %v823, %v826
    %vm828 = vweird.f32 %v822
    %vm829 = vweird.f32 %v823
    %vm830 = vmor %vm828, %vm829
    %v831 = vsel %vm830, %v823, %v827
    %v832 = vand.u32 2147483647, %v822
    %vm833 = vcmp.eq.f32.partialorder %v832, 8.507059e+37
    %v834 = vand.u32 %v822, 2147483648
    %v835 = vor.u32 1.1754944e-38, %v834
    %v836 = vsel %vm833, %v835, %v831
    %v837 = vmul.f32 1.0, %v836
    %v838 = vtanh.pop %v818
    %v840 = vrot.slane %v698, 6
    %v842 = vmul.f32 %v837, %v840
    %844 = vrot.lane.b32.xlu0 %v838, 64
    %v845 = vpop.permute.xlu0 %844
    %v847 = vmul.f32 %v837, %v845
    %849 = vrot.lane.b32.xlu0 %v847, 32
    %v850 = vpop.permute.xlu0 %849
    %v852 = vadd.f32 %v842, %v850
    %v853 = vtanh.pop %v852
    %855 = vrot.lane.b32.xlu0 %v853, 64
    %v856 = vpop.permute.xlu0 %855
    %v858 = vmul.f32 %v837, %v856
    %v859 = vadd.f32 %v813, %v65
    %v860 = vxor.u32 %v859, 2147483648
    %v861 = vmul.f32 %v860, 1.442695
    %v862 = vpow.pop %v861
    %v863 = vadd.f32 %v862, 1.0
    %v864 = vrcp.pop %v863
    %v865 = vmul.f32 %v863, %v864
    %v866 = vsub.f32 1.0, %v865
    %v867 = vmul.f32 %v864, %v866
    %v868 = vadd.f32 %v864, %v867
    %vm869 = vweird.f32 %v863
    %vm870 = vweird.f32 %v864
    %vm871 = vmor %vm869, %vm870
    %v872 = vsel %vm871, %v864, %v868
    %v873 = vand.u32 2147483647, %v863
    %vm874 = vcmp.eq.f32.partialorder %v873, 8.507059e+37
    %v875 = vand.u32 %v863, 2147483648
    %v876 = vor.u32 1.1754944e-38, %v875
    %v877 = vsel %vm874, %v876, %v872
    %v878 = vmul.f32 1.0, %v877
    %v879 = vtanh.pop %v859
    %v880 = vmul.f32 %v878, %v736
    %882 = vrot.lane.b32.xlu0 %v879, 64
    %v883 = vpop.permute.xlu0 %882
    %v885 = vmul.f32 %v878, %v883
    %887 = vrot.lane.b32.xlu0 %v885, 32
    %v888 = vpop.permute.xlu0 %887
    %v890 = vadd.f32 %v880, %v888
    %v891 = vtanh.pop %v890
    %893 = vrot.lane.b32.xlu0 %v891, 64
    %v894 = vpop.permute.xlu0 %893
    %v896 = vmul.f32 %v878, %v894
    %v897 = vmul.f32 %v896, %v277
    %899 = vrot.lane.b32.xlu0 %v897, 32
    %v900 = vpop.permute.xlu0 %899
    %v902 = vsel %vm284, %v900, 0.0
    %903 = vadd.xlane.f32.xlu0 %v902
    %v904 = vpop.xlane.xlu0 %903
    %v905 = vmax.f32 %v751, %v904
    %v906 = vsub.f32 %v751, %v905
    %v907 = vmul.f32 %v906, 1.442695
    %v908 = vpow.pop %v907
    %v909 = vsub.f32 %v904, %v905
    %v910 = vmul.f32 %v909, 1.442695
    %v911 = vpow.pop %v910
    %v912 = vmul.f32 %v908, %v759
    %v913 = vadd.f32 %v912, %v911
    %v914 = vmul.f32 %v908, %v762
    %v915 = vmul.f32 %v911, %v896
    %v916 = vadd.f32 %v914, %v915
    %918 = vrot.lane.b32.xlu0 %v858, 32
    %v919 = vpop.permute.xlu0 %918
    %v922 = vrot.slane %v896, 6
    %923 = vrot.lane.b32.xlu0 %v922, 64
    %v924 = vpop.permute.xlu0 %923
    %v926 = vsel %vm146, %v919, %v924
    %v928 = vrot.slane %v926, 2
    %v929 = vsel %vm148, %v928, 0
    %931 = vmatpush.msra.mxu0 0.0
    %932 = vmatpush.msra.mxu0 0.0
    %933 = vmatpush.msra.mxu0 0.0
    %934 = vmatpush.msra.mxu0 0.0
    %935 = vmatpush.msra.mxu0 0.0
    %936 = vmatpush.msra.mxu0 0.0
    %937 = vmatpush.msra.mxu0 0.0
    %938 = vmatpush.msra.mxu0 0.0
    %939 = vmatpush.msra.mxu0 %v60
    %940 = vmatpush.msra.mxu0 %v58
    %941 = vmatpush.msra.mxu0 %v56
    %942 = vmatpush.msra.mxu0 %v54
    %943 = vmatpush.msra.mxu0 %v52
    %944 = vmatpush.msra.mxu0 %v50
    %945 = vmatpush.msra.mxu0 %v48
    %946 = vmatpush.msra.mxu0 %v46
    %947 = vmatmul.f32.gmra.mxu0 %v929
    %v948 = vpop.f32.mrf.mxu0
    %v949 = vadd.f32 0.0, %v948
    %950 = vdwg.mxu0
    %951 = vmatpush.msra.mxu0 0.0
    %952 = vmatpush.msra.mxu0 0.0
    %953 = vmatpush.msra.mxu0 0.0
    %954 = vmatpush.msra.mxu0 0.0
    %955 = vmatpush.msra.mxu0 0.0
    %956 = vmatpush.msra.mxu0 0.0
    %957 = vmatpush.msra.mxu0 0.0
    %958 = vmatpush.msra.mxu0 0.0
    %959 = vmatpush.msra.mxu0 %v61
    %960 = vmatpush.msra.mxu0 %v59
    %961 = vmatpush.msra.mxu0 %v57
    %962 = vmatpush.msra.mxu0 %v55
    %963 = vmatpush.msra.mxu0 %v53
    %964 = vmatpush.msra.mxu0 %v51
    %965 = vmatpush.msra.mxu0 %v49
    %966 = vmatpush.msra.mxu0 %v47
    %967 = vmatmul.f32.gmra.mxu0 %v929
    %v968 = vpop.f32.mrf.mxu0
    %v969 = vadd.f32 0.0, %v968
    %970 = vdwg.mxu0
    %v972 = vrot.slane %v949, 4
    %v974 = vadd.f32 %v103, %v972
    %v975 = vxor.u32 %v974, 2147483648
    %v976 = vmul.f32 %v975, 1.442695
    %v977 = vpow.pop %v976
    %v978 = vadd.f32 %v977, 1.0
    %v979 = vrcp.pop %v978
    %v980 = vmul.f32 %v978, %v979
    %v981 = vsub.f32 1.0, %v980
    %v982 = vmul.f32 %v979, %v981
    %v983 = vadd.f32 %v979, %v982
    %vm984 = vweird.f32 %v978
    %vm985 = vweird.f32 %v979
    %vm986 = vmor %vm984, %vm985
    %v987 = vsel %vm986, %v979, %v983
    %v988 = vand.u32 2147483647, %v978
    %vm989 = vcmp.eq.f32.partialorder %v988, 8.507059e+37
    %v990 = vand.u32 %v978, 2147483648
    %v991 = vor.u32 1.1754944e-38, %v990
    %v992 = vsel %vm989, %v991, %v987
    %v993 = vmul.f32 1.0, %v992
    %v994 = vtanh.pop %v974
    %v996 = vrot.slane %v852, 6
    %v998 = vmul.f32 %v993, %v996
    %1000 = vrot.lane.b32.xlu0 %v994, 64
    %v1001 = vpop.permute.xlu0 %1000
    %v1003 = vmul.f32 %v993, %v1001
    %1005 = vrot.lane.b32.xlu0 %v1003, 32
    %v1006 = vpop.permute.xlu0 %1005
    %v1008 = vadd.f32 %v998, %v1006
    %v1009 = vtanh.pop %v1008
    %1011 = vrot.lane.b32.xlu0 %v1009, 64
    %v1012 = vpop.permute.xlu0 %1011
    %v1014 = vmul.f32 %v993, %v1012
    %v1015 = vadd.f32 %v969, %v65
    %v1016 = vxor.u32 %v1015, 2147483648
    %v1017 = vmul.f32 %v1016, 1.442695
    %v1018 = vpow.pop %v1017
    %v1019 = vadd.f32 %v1018, 1.0
    %v1020 = vrcp.pop %v1019
    %v1021 = vmul.f32 %v1019, %v1020
    %v1022 = vsub.f32 1.0, %v1021
    %v1023 = vmul.f32 %v1020, %v1022
    %v1024 = vadd.f32 %v1020, %v1023
    %vm1025 = vweird.f32 %v1019
    %vm1026 = vweird.f32 %v1020
    %vm1027 = vmor %vm1025, %vm1026
    %v1028 = vsel %vm1027, %v1020, %v1024
    %v1029 = vand.u32 2147483647, %v1019
    %vm1030 = vcmp.eq.f32.partialorder %v1029, 8.507059e+37
    %v1031 = vand.u32 %v1019, 2147483648
    %v1032 = vor.u32 1.1754944e-38, %v1031
    %v1033 = vsel %vm1030, %v1032, %v1028
    %v1034 = vmul.f32 1.0, %v1033
    %v1035 = vtanh.pop %v1015
    %v1036 = vmul.f32 %v1034, %v890
    %1038 = vrot.lane.b32.xlu0 %v1035, 64
    %v1039 = vpop.permute.xlu0 %1038
    %v1041 = vmul.f32 %v1034, %v1039
    %1043 = vrot.lane.b32.xlu0 %v1041, 32
    %v1044 = vpop.permute.xlu0 %1043
    %v1046 = vadd.f32 %v1036, %v1044
    %v1047 = vtanh.pop %v1046
    %1049 = vrot.lane.b32.xlu0 %v1047, 64
    %v1050 = vpop.permute.xlu0 %1049
    %v1052 = vmul.f32 %v1034, %v1050
    %v1053 = vmul.f32 %v1052, %v277
    %1055 = vrot.lane.b32.xlu0 %v1053, 32
    %v1056 = vpop.permute.xlu0 %1055
    %v1058 = vsel %vm284, %v1056, 0.0
    %1059 = vadd.xlane.f32.xlu0 %v1058
    %v1060 = vpop.xlane.xlu0 %1059
    %v1061 = vmax.f32 %v905, %v1060
    %v1062 = vsub.f32 %v905, %v1061
    %v1063 = vmul.f32 %v1062, 1.442695
    %v1064 = vpow.pop %v1063
    %v1065 = vsub.f32 %v1060, %v1061
    %v1066 = vmul.f32 %v1065, 1.442695
    %v1067 = vpow.pop %v1066
    %v1068 = vmul.f32 %v1064, %v913
    %v1069 = vadd.f32 %v1068, %v1067
    %v1070 = vmul.f32 %v1064, %v916
    %v1071 = vmul.f32 %v1067, %v1052
    %v1072 = vadd.f32 %v1070, %v1071
    %1074 = vrot.lane.b32.xlu0 %v1014, 32
    %v1075 = vpop.permute.xlu0 %1074
    %v1078 = vrot.slane %v1052, 4
    %1079 = vrot.lane.b32.xlu0 %v1078, 64
    %v1080 = vpop.permute.xlu0 %1079
    %v1082 = vsel %vm146, %v1075, %v1080
    %v1084 = vrot.slane %v1082, 4
    %v1085 = vsel %vm148, %v1084, 0
    %1087 = vmatpush.msra.mxu0 0.0
    %1088 = vmatpush.msra.mxu0 0.0
    %1089 = vmatpush.msra.mxu0 0.0
    %1090 = vmatpush.msra.mxu0 0.0
    %1091 = vmatpush.msra.mxu0 0.0
    %1092 = vmatpush.msra.mxu0 0.0
    %1093 = vmatpush.msra.mxu0 0.0
    %1094 = vmatpush.msra.mxu0 0.0
    %1095 = vmatpush.msra.mxu0 %v60
    %1096 = vmatpush.msra.mxu0 %v58
    %1097 = vmatpush.msra.mxu0 %v56
    %1098 = vmatpush.msra.mxu0 %v54
    %1099 = vmatpush.msra.mxu0 %v52
    %1100 = vmatpush.msra.mxu0 %v50
    %1101 = vmatpush.msra.mxu0 %v48
    %1102 = vmatpush.msra.mxu0 %v46
    %1103 = vmatmul.f32.gmra.mxu0 %v1085
    %v1104 = vpop.f32.mrf.mxu0
    %v1105 = vadd.f32 0.0, %v1104
    %1106 = vdwg.mxu0
    %1107 = vmatpush.msra.mxu0 0.0
    %1108 = vmatpush.msra.mxu0 0.0
    %1109 = vmatpush.msra.mxu0 0.0
    %1110 = vmatpush.msra.mxu0 0.0
    %1111 = vmatpush.msra.mxu0 0.0
    %1112 = vmatpush.msra.mxu0 0.0
    %1113 = vmatpush.msra.mxu0 0.0
    %1114 = vmatpush.msra.mxu0 0.0
    %1115 = vmatpush.msra.mxu0 %v61
    %1116 = vmatpush.msra.mxu0 %v59
    %1117 = vmatpush.msra.mxu0 %v57
    %1118 = vmatpush.msra.mxu0 %v55
    %1119 = vmatpush.msra.mxu0 %v53
    %1120 = vmatpush.msra.mxu0 %v51
    %1121 = vmatpush.msra.mxu0 %v49
    %1122 = vmatpush.msra.mxu0 %v47
    %1123 = vmatmul.f32.gmra.mxu0 %v1085
    %v1124 = vpop.f32.mrf.mxu0
    %v1125 = vadd.f32 0.0, %v1124
    %1126 = vdwg.mxu0
    %v1128 = vrot.slane %v1105, 2
    %v1130 = vadd.f32 %v103, %v1128
    %v1131 = vxor.u32 %v1130, 2147483648
    %v1132 = vmul.f32 %v1131, 1.442695
    %v1133 = vpow.pop %v1132
    %v1134 = vadd.f32 %v1133, 1.0
    %v1135 = vrcp.pop %v1134
    %v1136 = vmul.f32 %v1134, %v1135
    %v1137 = vsub.f32 1.0, %v1136
    %v1138 = vmul.f32 %v1135, %v1137
    %v1139 = vadd.f32 %v1135, %v1138
    %vm1140 = vweird.f32 %v1134
    %vm1141 = vweird.f32 %v1135
    %vm1142 = vmor %vm1140, %vm1141
    %v1143 = vsel %vm1142, %v1135, %v1139
    %v1144 = vand.u32 2147483647, %v1134
    %vm1145 = vcmp.eq.f32.partialorder %v1144, 8.507059e+37
    %v1146 = vand.u32 %v1134, 2147483648
    %v1147 = vor.u32 1.1754944e-38, %v1146
    %v1148 = vsel %vm1145, %v1147, %v1143
    %v1149 = vmul.f32 1.0, %v1148
    %v1150 = vtanh.pop %v1130
    %v1152 = vrot.slane %v1008, 6
    %v1154 = vmul.f32 %v1149, %v1152
    %1156 = vrot.lane.b32.xlu0 %v1150, 64
    %v1157 = vpop.permute.xlu0 %1156
    %v1159 = vmul.f32 %v1149, %v1157
    %1161 = vrot.lane.b32.xlu0 %v1159, 32
    %v1162 = vpop.permute.xlu0 %1161
    %v1164 = vadd.f32 %v1154, %v1162
    %v1165 = vtanh.pop %v1164
    %1167 = vrot.lane.b32.xlu0 %v1165, 64
    %v1168 = vpop.permute.xlu0 %1167
    %v1170 = vmul.f32 %v1149, %v1168
    %v1171 = vadd.f32 %v1125, %v65
    %v1172 = vxor.u32 %v1171, 2147483648
    %v1173 = vmul.f32 %v1172, 1.442695
    %v1174 = vpow.pop %v1173
    %v1175 = vadd.f32 %v1174, 1.0
    %v1176 = vrcp.pop %v1175
    %v1177 = vmul.f32 %v1175, %v1176
    %v1178 = vsub.f32 1.0, %v1177
    %v1179 = vmul.f32 %v1176, %v1178
    %v1180 = vadd.f32 %v1176, %v1179
    %vm1181 = vweird.f32 %v1175
    %vm1182 = vweird.f32 %v1176
    %vm1183 = vmor %vm1181, %vm1182
    %v1184 = vsel %vm1183, %v1176, %v1180
    %v1185 = vand.u32 2147483647, %v1175
    %vm1186 = vcmp.eq.f32.partialorder %v1185, 8.507059e+37
    %v1187 = vand.u32 %v1175, 2147483648
    %v1188 = vor.u32 1.1754944e-38, %v1187
    %v1189 = vsel %vm1186, %v1188, %v1184
    %v1190 = vmul.f32 1.0, %v1189
    %v1191 = vtanh.pop %v1171
    %v1192 = vmul.f32 %v1190, %v1046
    %1194 = vrot.lane.b32.xlu0 %v1191, 64
    %v1195 = vpop.permute.xlu0 %1194
    %v1197 = vmul.f32 %v1190, %v1195
    %1199 = vrot.lane.b32.xlu0 %v1197, 32
    %v1200 = vpop.permute.xlu0 %1199
    %v1202 = vadd.f32 %v1192, %v1200
    %v1203 = vtanh.pop %v1202
    %1205 = vrot.lane.b32.xlu0 %v1203, 64
    %v1206 = vpop.permute.xlu0 %1205
    %v1208 = vmul.f32 %v1190, %v1206
    %v1209 = vmul.f32 %v1208, %v277
    %1211 = vrot.lane.b32.xlu0 %v1209, 32
    %v1212 = vpop.permute.xlu0 %1211
    %v1214 = vsel %vm284, %v1212, 0.0
    %1215 = vadd.xlane.f32.xlu0 %v1214
    %v1216 = vpop.xlane.xlu0 %1215
    %v1217 = vmax.f32 %v1061, %v1216
    %v1218 = vsub.f32 %v1061, %v1217
    %v1219 = vmul.f32 %v1218, 1.442695
    %v1220 = vpow.pop %v1219
    %v1221 = vsub.f32 %v1216, %v1217
    %v1222 = vmul.f32 %v1221, 1.442695
    %v1223 = vpow.pop %v1222
    %v1224 = vmul.f32 %v1220, %v1069
    %v1225 = vadd.f32 %v1224, %v1223
    %v1226 = vmul.f32 %v1220, %v1072
    %v1227 = vmul.f32 %v1223, %v1208
    %v1228 = vadd.f32 %v1226, %v1227
    %1230 = vrot.lane.b32.xlu0 %v1170, 32
    %v1231 = vpop.permute.xlu0 %1230
    %v1234 = vrot.slane %v1208, 2
    %1235 = vrot.lane.b32.xlu0 %v1234, 64
    %v1236 = vpop.permute.xlu0 %1235
    %v1238 = vsel %vm146, %v1231, %v1236
    %v1240 = vrot.slane %v1238, 6
    %v1241 = vsel %vm148, %v1240, 0
    %1243 = vmatpush.msra.mxu0 0.0
    %1244 = vmatpush.msra.mxu0 0.0
    %1245 = vmatpush.msra.mxu0 0.0
    %1246 = vmatpush.msra.mxu0 0.0
    %1247 = vmatpush.msra.mxu0 0.0
    %1248 = vmatpush.msra.mxu0 0.0
    %1249 = vmatpush.msra.mxu0 0.0
    %1250 = vmatpush.msra.mxu0 0.0
    %1251 = vmatpush.msra.mxu0 %v61
    %1252 = vmatpush.msra.mxu0 %v59
    %1253 = vmatpush.msra.mxu0 %v57
    %1254 = vmatpush.msra.mxu0 %v55
    %1255 = vmatpush.msra.mxu0 %v53
    %1256 = vmatpush.msra.mxu0 %v51
    %1257 = vmatpush.msra.mxu0 %v49
    %1258 = vmatpush.msra.mxu0 %v47
    %1259 = vmatmul.f32.gmra.mxu0 %v1241
    %v1260 = vpop.f32.mrf.mxu0
    %v1261 = vadd.f32 0.0, %v1260
    %1262 = vdwg.mxu0
    %v1263 = vadd.f32 %v1261, %v65
    %v1264 = vxor.u32 %v1263, 2147483648
    %v1265 = vmul.f32 %v1264, 1.442695
    %v1266 = vpow.pop %v1265
    %v1267 = vadd.f32 %v1266, 1.0
    %v1268 = vrcp.pop %v1267
    %v1269 = vmul.f32 %v1267, %v1268
    %v1270 = vsub.f32 1.0, %v1269
    %v1271 = vmul.f32 %v1268, %v1270
    %v1272 = vadd.f32 %v1268, %v1271
    %vm1273 = vweird.f32 %v1267
    %vm1274 = vweird.f32 %v1268
    %vm1275 = vmor %vm1273, %vm1274
    %v1276 = vsel %vm1275, %v1268, %v1272
    %v1277 = vand.u32 2147483647, %v1267
    %vm1278 = vcmp.eq.f32.partialorder %v1277, 8.507059e+37
    %v1279 = vand.u32 %v1267, 2147483648
    %v1280 = vor.u32 1.1754944e-38, %v1279
    %v1281 = vsel %vm1278, %v1280, %v1276
    %v1282 = vmul.f32 1.0, %v1281
    %v1283 = vtanh.pop %v1263
    %v1284 = vmul.f32 %v1282, %v1202
    %1286 = vrot.lane.b32.xlu0 %v1283, 64
    %v1287 = vpop.permute.xlu0 %1286
    %v1289 = vmul.f32 %v1282, %v1287
    %1291 = vrot.lane.b32.xlu0 %v1289, 32
    %v1292 = vpop.permute.xlu0 %1291
    %v1294 = vadd.f32 %v1284, %v1292
    %v1295 = vtanh.pop %v1294
    %1297 = vrot.lane.b32.xlu0 %v1295, 64
    %v1298 = vpop.permute.xlu0 %1297
    %v1300 = vmul.f32 %v1282, %v1298
    %v1301 = vmul.f32 %v1300, %v277
    %1303 = vrot.lane.b32.xlu0 %v1301, 32
    %v1304 = vpop.permute.xlu0 %1303
    %v1306 = vsel %vm284, %v1304, 0.0
    %1307 = vadd.xlane.f32.xlu0 %v1306
    %v1308 = vpop.xlane.xlu0 %1307
    %v1309 = vmax.f32 %v1217, %v1308
    %v1310 = vsub.f32 %v1217, %v1309
    %v1311 = vmul.f32 %v1310, 1.442695
    %v1312 = vpow.pop %v1311
    %v1313 = vsub.f32 %v1308, %v1309
    %v1314 = vmul.f32 %v1313, 1.442695
    %v1315 = vpow.pop %v1314
    %v1316 = vmul.f32 %v1312, %v1225
    %v1317 = vadd.f32 %v1316, %v1315
    %v1318 = vmul.f32 %v1312, %v1228
    %v1319 = vmul.f32 %v1315, %v1300
    %v1320 = vadd.f32 %v1318, %v1319
    %v1321 = vrcp.pop %v1317
    %v1322 = vmul.f32 %v1317, %v1321
    %v1323 = vsub.f32 1.0, %v1322
    %v1324 = vmul.f32 %v1321, %v1323
    %v1325 = vadd.f32 %v1321, %v1324
    %vm1326 = vweird.f32 %v1317
    %vm1327 = vweird.f32 %v1321
    %vm1328 = vmor %vm1326, %vm1327
    %v1329 = vsel %vm1328, %v1321, %v1325
    %v1330 = vand.u32 2147483647, %v1317
    %vm1331 = vcmp.eq.f32.partialorder %v1330, 8.507059e+37
    %v1332 = vand.u32 %v1317, 2147483648
    %v1333 = vor.u32 1.1754944e-38, %v1332
    %v1334 = vsel %vm1331, %v1333, %v1329
    %v1335 = vmul.f32 %v1320, %v1334
    %v1336 = vld [vmem:[%s6] sm:$0xff]
    %v1337 = vld [vmem:[%s6 + $0x8] sm:$0xff]
    %v1338 = vld [vmem:[%s6 + $0x10] sm:$0xff]
    %v1339 = vld [vmem:[%s6 + $0x18] sm:$0xff]
    %v1340 = vld [vmem:[%s7] sm:$0x1]
    %v1342 = vperm.slane %v1340, 0
    %1345 = vrot.lane.b32.xlu0 %v1335, 32
    %v1346 = vpop.permute.xlu0 %1345
    %v1347 = vsel %vm146, %v1346, 0
    %1349 = vmatpush.msra.mxu0 0.0
    %1350 = vmatpush.msra.mxu0 0.0
    %1351 = vmatpush.msra.mxu0 0.0
    %1352 = vmatpush.msra.mxu0 0.0
    %1353 = vmatpush.msra.mxu0 0.0
    %1354 = vmatpush.msra.mxu0 0.0
    %1355 = vmatpush.msra.mxu0 0.0
    %1356 = vmatpush.msra.mxu0 0.0
    %1357 = vmatpush.msra.mxu0 0.0
    %1358 = vmatpush.msra.mxu0 0.0
    %1359 = vmatpush.msra.mxu0 0.0
    %1360 = vmatpush.msra.mxu0 0.0
    %1361 = vmatpush.msra.mxu0 %v1339
    %1362 = vmatpush.msra.mxu0 %v1338
    %1363 = vmatpush.msra.mxu0 %v1337
    %1364 = vmatpush.msra.mxu0 %v1336
    %1365 = vmatmul.f32.gmra.mxu0 %v1347
    %v1366 = vpop.f32.mrf.mxu0
    %v1367 = vadd.f32 %v1342, %v1366
    %1368 = vdwg.mxu0
    %vm1369 = vcmask 25600
    %1370 = vst.msk [vmem:[#allocation5] sm:$0x3] %vm1369, %v1367
    // Predicated region
    $region38: #{tpu_custom_call.1} parent=1 // pred_check
      _
    $region39: #{tpu_custom_call.1} parent=1 // pred_check_branch
      %1372 = sbr.rel (0) target = $region41
    $region40: #{tpu_custom_call.1} parent=1 // pred_region
      %1374 = vsyncadd [#allocation4], 0
      %s1376 = sshll.u32 [#allocation5], 4
      %s1377 = int_to_ptr.vmem [resolvable:$true] %s1376
      %s1378 = sshll.u32 %s8, 4
      %s1379 = int_to_ptr.hbm [resolvable:$true] %s1378
      %1381 = dma.vmem_to_hbm [thread:$0]  %s1377, 32, %s1379, [#allocation4]
    $region41: #{tpu_custom_call.1} parent=1 // pred_fallthru
      _
    // Predicated region
    $region42: #{tpu_custom_call.1} parent=1 // pred_check
      _
    $region43: #{tpu_custom_call.1} parent=1 // pred_check_branch
      %1383 = sbr.rel (0) target = $region45
    $region44: #{tpu_custom_call.1} parent=1 // pred_region
      %1385 = dma.done [#allocation4], 32
    $region45: #{tpu_custom_call.1} parent=1 // pred_fallthru
      _
    %1386 = vsyncpa [#allocation3], 1
    %1387 = vsyncpa [#allocation4], 1

</llo_original>
